<compile_context>
chip_gen: v6e
topology: v6e:2x2x1
jax: 0.10.0
libtpu: 0.0.40
codegen_flags: <defaults>
</compile_context>

<pallas_src>
import jax
import jax.numpy as jnp
from jax.experimental import pallas as pl
from jax.experimental.pallas import tpu as pltpu


def _round_up(n, m):
    return ((n + m - 1) // m) * m


def lstm_forward(x, params):
    """x: (B, T, I) f32.  Returns (B, O) f32."""
    B, T, I = x.shape
    H = params["whh0"].shape[0]
    O = params["wfc"].shape[1]
    H2, H4, H8 = 2 * H, 4 * H, 8 * H

    Bp = _round_up(B, 16)      # bf16 sublane-pack aligned batch
    Ipad = _round_up(I, 128)   # lane-dense x rows / projection contraction dim
    Opad = _round_up(O, 128)   # lane-dense output store

    f32 = jnp.float32
    bf16 = jnp.bfloat16

    # ---- wrapper-side layout / padding / dtype prep (plain XLA) ----
    # Time-major rows, plus one trailing all-zero time block (used by the final
    # layer-1-only wave so its addend is the pure biases).
    xt = jnp.transpose(x, (1, 0, 2))                                   # (T, B, I)
    xt = jnp.pad(xt, ((0, 1), (0, Bp - B), (0, Ipad - I)))             # (T+1, Bp, Ipad)
    x_flat = xt.reshape((T + 1) * Bp, Ipad).astype(bf16)

    def to_gate_major(w):  # columns [L0: i f g o | L1: i f g o] -> [i0 i1 f0 f1 g0 g1 o0 o1]
        r = w.shape[0]
        return w.reshape(r, 2, 4, H).transpose(0, 2, 1, 3).reshape(r, H8)

    # Layer-0 input projection weight, widened to 8H with zero layer-1 columns.
    wih0_pad = jnp.pad(params["wih0"], ((0, Ipad - I), (0, 0)))        # (Ipad, 4H)
    wih0_gm = to_gate_major(
        jnp.concatenate([wih0_pad, jnp.zeros((Ipad, H4), f32)], axis=1)
    ).astype(bf16)                                                     # (Ipad, 8H)

    # Combined bias: layer-0 lanes = b0, layer-1 lanes = b1 (gate-major).
    bias_gm = to_gate_major(
        jnp.concatenate([params["b0"], params["b1"]], axis=1))         # (1, 8H) f32

    # Fused wavefront recurrence weight (rows: [h0 | h1]).
    zeros_h = jnp.zeros((H, H4), f32)
    w_lm = jnp.concatenate(
        [jnp.concatenate([params["whh0"], params["wih1"]], axis=1),    # (H, 8H)
         jnp.concatenate([zeros_h,        params["whh1"]], axis=1)],   # (H, 8H)
        axis=0)                                                        # (2H, 8H)
    wwave_gm = to_gate_major(w_lm).astype(bf16)                        # (2H, 8H)

    # Linear head: zero top half so the combined (Bp, 2H) h is the LHS directly.
    wfc_pad = jnp.pad(params["wfc"], ((0, 0), (0, Opad - O)))          # (H, Opad)
    wfc_big = jnp.concatenate([jnp.zeros((H, Opad), f32), wfc_pad],
                              axis=0).astype(bf16)                     # (2H, Opad)
    bfc_pad = jnp.pad(params["bfc"], ((0, 0), (0, Opad - O)))          # (1, Opad) f32

    def kernel(x_ref, wih0_ref, bias_ref, wwave_ref, wfc_ref, bfc_ref,
               out_ref, proj_ref):
        # Hoisted projection of all time steps (+ the trailing zero block that
        # yields pure biases).  Stored in VMEM scratch so it is NOT pinned in
        # vregs across the unrolled recurrence.
        proj_ref[...] = (jnp.dot(x_ref[...], wih0_ref[...],
                                 preferred_element_type=jnp.float32)
                         + bias_ref[...])                              # ((T+1)*Bp, 8H) f32

        def gates(g, c):
            # Gate-major layout: every slice is a full (Bp, 2H) = 128-lane block.
            i = jax.nn.sigmoid(g[:, 0 * H2:1 * H2])
            f = jax.nn.sigmoid(g[:, 1 * H2:2 * H2])
            gg = jnp.tanh(g[:, 2 * H2:3 * H2])
            o = jax.nn.sigmoid(g[:, 3 * H2:4 * H2])
            c_new = f * c + i * gg
            return o * jnp.tanh(c_new), c_new

        # Wave 0: only layer 0 advances; recurrent state is zero so the fused
        # matmul is skipped.  Zero out the spurious layer-1 half afterwards.
        c = jnp.zeros((Bp, H2), jnp.float32)
        h, c = gates(proj_ref[0:Bp, :], c)
        mask0 = (jax.lax.broadcasted_iota(jnp.int32, (Bp, H2), 1) < H
                 ).astype(jnp.float32)
        h = h * mask0
        c = c * mask0

        # Waves 1..T: one fused matmul per wave advances layer-0 step w and
        # layer-1 step w-1.  Wave T's layer-0 half (zero input row block) is
        # garbage and never read.  (T is small & static -> full unroll.)
        for w in range(1, T + 1):
            g = (jnp.dot(h.astype(jnp.bfloat16), wwave_ref[...],
                         preferred_element_type=jnp.float32)
                 + proj_ref[w * Bp:(w + 1) * Bp, :])
            h, c = gates(g, c)

        # Linear head on the last-timestep top-layer hidden state (top H rows
        # of wfc are zero, so the combined h is used directly).
        out_ref[...] = (jnp.dot(h.astype(jnp.bfloat16), wfc_ref[...],
                                preferred_element_type=jnp.float32)
                        + bfc_ref[...])

    flops = (2 * (T + 1) * Bp * Ipad * H8       # hoisted projection
             + 2 * T * Bp * H2 * H8             # fused recurrence matmuls
             + 2 * Bp * H2 * Opad)              # linear head
    transcendentals = 5 * (T + 1) * Bp * H2     # sigmoid/tanh per wave
    bytes_accessed = (x_flat.size * 2 + wih0_gm.size * 2 + wwave_gm.size * 2
                      + wfc_big.size * 2 + bias_gm.size * 4 + bfc_pad.size * 4
                      + Bp * Opad * 4)

    vmem = pl.BlockSpec(memory_space=pltpu.MemorySpace.VMEM)
    out_pad = pl.pallas_call(
        kernel,
        out_shape=jax.ShapeDtypeStruct((Bp, Opad), jnp.float32),
        in_specs=[vmem] * 6,
        out_specs=vmem,
        scratch_shapes=[pltpu.VMEM(((T + 1) * Bp, H8), jnp.float32)],
        cost_estimate=pl.CostEstimate(flops=flops,
                                      transcendentals=transcendentals,
                                      bytes_accessed=bytes_accessed),
    )(x_flat, wih0_gm, bias_gm, wwave_gm, wfc_big, bfc_pad)

    return out_pad[:B, :O]


def lstm_reference(x, params):
    """Pure-JAX f32 reference (sequential 2-layer LSTM + Linear, eval mode)."""
    B, T, _ = x.shape
    H = params["whh0"].shape[0]

    def cell(x_t, h, c, wih, whh, b):
        g = x_t @ wih + h @ whh + b
        i = jax.nn.sigmoid(g[:, 0 * H:1 * H])
        f = jax.nn.sigmoid(g[:, 1 * H:2 * H])
        gg = jnp.tanh(g[:, 2 * H:3 * H])
        o = jax.nn.sigmoid(g[:, 3 * H:4 * H])
        c = f * c + i * gg
        return o * jnp.tanh(c), c

    z = jnp.zeros((B, H), jnp.float32)
    h0, c0, h1, c1 = z, z, z, z
    for t in range(T):
        h0, c0 = cell(x[:, t, :], h0, c0, params["wih0"], params["whh0"], params["b0"])
        h1, c1 = cell(h0, h1, c1, params["wih1"], params["whh1"], params["b1"])
    return h1 @ params["wfc"] + params["bfc"]


def init_params(key, input_size=50, hidden_size=64, output_size=10):
    """Deterministic init mirroring PyTorch's U(-1/sqrt(H), 1/sqrt(H)); weights stored transposed."""
    H, I, O = hidden_size, input_size, output_size
    bound = 1.0 / jnp.sqrt(jnp.float32(H))
    ks = jax.random.split(key, 12)
    u = lambda k, shape: jax.random.uniform(k, shape, jnp.float32, -bound, bound)
    return {
        # layer 0 of nn.LSTM (stored transposed: (in, 4H)), gate order i,f,g,o
        "wih0": u(ks[0], (I, 4 * H)),
        "whh0": u(ks[1], (H, 4 * H)),
        "b0":   (u(ks[2], (1, 4 * H)) + u(ks[3], (1, 4 * H))),   # b_ih + b_hh
        # layer 1 of nn.LSTM
        "wih1": u(ks[4], (H, 4 * H)),
        "whh1": u(ks[5], (H, 4 * H)),
        "b1":   (u(ks[6], (1, 4 * H)) + u(ks[7], (1, 4 * H))),
        # Linear head (stored transposed: (H, O))
        "wfc":  u(ks[8], (H, O)),
        "bfc":  u(ks[9], (1, O)),
    }


if __name__ == "__main__":
    key = jax.random.PRNGKey(0)
    k_x, k_p = jax.random.split(key)

    batch, seq, input_size = 2, 8, 50
    hidden_size, output_size = 64, 10

    x = jax.random.normal(k_x, (batch, seq, input_size), jnp.float32)
    params = init_params(k_p, input_size, hidden_size, output_size)

    y = jax.block_until_ready(lstm_forward(x, params))
    assert y.shape == (batch, output_size) and y.dtype == jnp.float32

    # Sanity vs. pure-JAX f32 reference (bf16 weights in the kernel -> loose tol).
    y_ref = jax.block_until_ready(lstm_reference(x, params))
    assert float(jnp.max(jnp.abs(y - y_ref))) < 0.1

    print("KERNEL_OK")
</pallas_src>

<mosaic_0001>
module attributes {stable_mosaic.version = 11 : i64} {
  func.func @kernel(%arg0: memref<144x128xbf16, #tpu.memory_space<vmem>>, %arg1: memref<128x512xbf16, #tpu.memory_space<vmem>>, %arg2: memref<1x512xf32, #tpu.memory_space<vmem>>, %arg3: memref<128x512xbf16, #tpu.memory_space<vmem>>, %arg4: memref<128x128xbf16, #tpu.memory_space<vmem>>, %arg5: memref<1x128xf32, #tpu.memory_space<vmem>>, %arg6: memref<16x128xf32, #tpu.memory_space<vmem>>, %arg7: memref<144x512xf32, #tpu.memory_space<vmem>>) attributes {dimension_semantics = [], scalar_prefetch = 0 : i64, scratch_operands = 1 : i64, tpu.core_type = #tpu.core_type<tc>} {
    %c0 = arith.constant 0 : index
    %c0_0 = arith.constant 0 : index
    %0 = vector.load %arg0[%c0, %c0_0] : memref<144x128xbf16, #tpu.memory_space<vmem>>, vector<144x128xbf16>
    %c0_1 = arith.constant 0 : index
    %c0_2 = arith.constant 0 : index
    %1 = vector.load %arg1[%c0_1, %c0_2] : memref<128x512xbf16, #tpu.memory_space<vmem>>, vector<128x512xbf16>
    %cst = arith.constant dense<0.000000e+00> : vector<144x512xf32>
    %2 = tpu.matmul %0, %1, %cst {dimension_numbers = #tpu.dot_dimension_numbers<[1], [0], [0], [1], [0, 0, 1, 1], [], []>} : vector<144x128xbf16>, vector<128x512xbf16>, vector<144x512xf32> -> vector<144x512xf32>
    %c0_3 = arith.constant 0 : index
    %c0_4 = arith.constant 0 : index
    %3 = vector.load %arg2[%c0_3, %c0_4] : memref<1x512xf32, #tpu.memory_space<vmem>>, vector<1x512xf32>
    %4 = vector.broadcast %3 : vector<1x512xf32> to vector<144x512xf32>
    %5 = arith.addf %2, %4 : vector<144x512xf32>
    %c0_5 = arith.constant 0 : index
    %c0_6 = arith.constant 0 : index
    %6 = vector.load %arg7[%c0_5, %c0_6] : memref<144x512xf32, #tpu.memory_space<vmem>>, vector<144x512xf32>
    tpu.vector_store %arg7[%c0_5, %c0_6], %5 {strides = array<i32>} : memref<144x512xf32, #tpu.memory_space<vmem>>, vector<144x512xf32>,
    %cst_7 = arith.constant 0.000000e+00 : f32
    %7 = vector.broadcast %cst_7 : f32 to vector<16x128xf32>
    %c0_8 = arith.constant 0 : index
    %c0_9 = arith.constant 0 : index
    %8 = vector.load %arg7[%c0_8, %c0_9] : memref<144x512xf32, #tpu.memory_space<vmem>>, vector<16x512xf32>
    %9 = vector.extract_strided_slice %8 {offsets = [0, 0], sizes = [16, 128], strides = [1, 1]} : vector<16x512xf32> to vector<16x128xf32>
    %10 = arith.negf %9 : vector<16x128xf32>
    %11 = math.exp %10 : vector<16x128xf32>
    %cst_10 = arith.constant 1.000000e+00 : f32
    %12 = vector.broadcast %cst_10 : f32 to vector<16x128xf32>
    %13 = arith.addf %12, %11 : vector<16x128xf32>
    %14 = arith.divf %12, %13 : vector<16x128xf32>
    %15 = vector.extract_strided_slice %8 {offsets = [0, 128], sizes = [16, 128], strides = [1, 1]} : vector<16x512xf32> to vector<16x128xf32>
    %16 = arith.negf %15 : vector<16x128xf32>
    %17 = math.exp %16 : vector<16x128xf32>
    %cst_11 = arith.constant 1.000000e+00 : f32
    %18 = vector.broadcast %cst_11 : f32 to vector<16x128xf32>
    %19 = arith.addf %18, %17 : vector<16x128xf32>
    %20 = arith.divf %18, %19 : vector<16x128xf32>
    %21 = vector.extract_strided_slice %8 {offsets = [0, 256], sizes = [16, 128], strides = [1, 1]} : vector<16x512xf32> to vector<16x128xf32>
    %22 = math.tanh %21 : vector<16x128xf32>
    %23 = vector.extract_strided_slice %8 {offsets = [0, 384], sizes = [16, 128], strides = [1, 1]} : vector<16x512xf32> to vector<16x128xf32>
    %24 = arith.negf %23 : vector<16x128xf32>
    %25 = math.exp %24 : vector<16x128xf32>
    %cst_12 = arith.constant 1.000000e+00 : f32
    %26 = vector.broadcast %cst_12 : f32 to vector<16x128xf32>
    %27 = arith.addf %26, %25 : vector<16x128xf32>
    %28 = arith.divf %26, %27 : vector<16x128xf32>
    %29 = arith.mulf %20, %7 : vector<16x128xf32>
    %30 = arith.mulf %14, %22 : vector<16x128xf32>
    %31 = arith.addf %29, %30 : vector<16x128xf32>
    %32 = math.tanh %31 : vector<16x128xf32>
    %33 = arith.mulf %28, %32 : vector<16x128xf32>
    %34 = tpu.iota {dimensions = array<i32: 1>} : vector<16x128xi32>
    %c64_i32 = arith.constant 64 : i32
    %35 = vector.broadcast %c64_i32 : i32 to vector<16x128xi32>
    %36 = arith.cmpi slt, %34, %35 : vector<16x128xi32>
    %37 = arith.extui %36 : vector<16x128xi1> to vector<16x128xi32>
    %38 = arith.sitofp %37 : vector<16x128xi32> to vector<16x128xf32>
    %39 = arith.mulf %33, %38 : vector<16x128xf32>
    %40 = arith.mulf %31, %38 : vector<16x128xf32>
    %41 = arith.truncf %39 : vector<16x128xf32> to vector<16x128xbf16>
    %c0_13 = arith.constant 0 : index
    %c0_14 = arith.constant 0 : index
    %42 = vector.load %arg3[%c0_13, %c0_14] : memref<128x512xbf16, #tpu.memory_space<vmem>>, vector<128x512xbf16>
    %cst_15 = arith.constant dense<0.000000e+00> : vector<16x512xf32>
    %43 = tpu.matmul %41, %42, %cst_15 {dimension_numbers = #tpu.dot_dimension_numbers<[1], [0], [0], [1], [0, 0, 1, 1], [], []>} : vector<16x128xbf16>, vector<128x512xbf16>, vector<16x512xf32> -> vector<16x512xf32>
    %c16 = arith.constant 16 : index
    %c0_16 = arith.constant 0 : index
    %44 = vector.load %arg7[%c16, %c0_16] : memref<144x512xf32, #tpu.memory_space<vmem>>, vector<16x512xf32>
    %45 = arith.addf %43, %44 : vector<16x512xf32>
    %46 = vector.extract_strided_slice %45 {offsets = [0, 0], sizes = [16, 128], strides = [1, 1]} : vector<16x512xf32> to vector<16x128xf32>
    %47 = arith.negf %46 : vector<16x128xf32>
    %48 = math.exp %47 : vector<16x128xf32>
    %cst_17 = arith.constant 1.000000e+00 : f32
    %49 = vector.broadcast %cst_17 : f32 to vector<16x128xf32>
    %50 = arith.addf %49, %48 : vector<16x128xf32>
    %51 = arith.divf %49, %50 : vector<16x128xf32>
    %52 = vector.extract_strided_slice %45 {offsets = [0, 128], sizes = [16, 128], strides = [1, 1]} : vector<16x512xf32> to vector<16x128xf32>
    %53 = arith.negf %52 : vector<16x128xf32>
    %54 = math.exp %53 : vector<16x128xf32>
    %cst_18 = arith.constant 1.000000e+00 : f32
    %55 = vector.broadcast %cst_18 : f32 to vector<16x128xf32>
    %56 = arith.addf %55, %54 : vector<16x128xf32>
    %57 = arith.divf %55, %56 : vector<16x128xf32>
    %58 = vector.extract_strided_slice %45 {offsets = [0, 256], sizes = [16, 128], strides = [1, 1]} : vector<16x512xf32> to vector<16x128xf32>
    %59 = math.tanh %58 : vector<16x128xf32>
    %60 = vector.extract_strided_slice %45 {offsets = [0, 384], sizes = [16, 128], strides = [1, 1]} : vector<16x512xf32> to vector<16x128xf32>
    %61 = arith.negf %60 : vector<16x128xf32>
    %62 = math.exp %61 : vector<16x128xf32>
    %cst_19 = arith.constant 1.000000e+00 : f32
    %63 = vector.broadcast %cst_19 : f32 to vector<16x128xf32>
    %64 = arith.addf %63, %62 : vector<16x128xf32>
    %65 = arith.divf %63, %64 : vector<16x128xf32>
    %66 = arith.mulf %57, %40 : vector<16x128xf32>
    %67 = arith.mulf %51, %59 : vector<16x128xf32>
    %68 = arith.addf %66, %67 : vector<16x128xf32>
    %69 = math.tanh %68 : vector<16x128xf32>
    %70 = arith.mulf %65, %69 : vector<16x128xf32>
    %71 = arith.truncf %70 : vector<16x128xf32> to vector<16x128xbf16>
    %c0_20 = arith.constant 0 : index
    %c0_21 = arith.constant 0 : index
    %72 = vector.load %arg3[%c0_20, %c0_21] : memref<128x512xbf16, #tpu.memory_space<vmem>>, vector<128x512xbf16>
    %cst_22 = arith.constant dense<0.000000e+00> : vector<16x512xf32>
    %73 = tpu.matmul %71, %72, %cst_22 {dimension_numbers = #tpu.dot_dimension_numbers<[1], [0], [0], [1], [0, 0, 1, 1], [], []>} : vector<16x128xbf16>, vector<128x512xbf16>, vector<16x512xf32> -> vector<16x512xf32>
    %c32 = arith.constant 32 : index
    %c0_23 = arith.constant 0 : index
    %74 = vector.load %arg7[%c32, %c0_23] : memref<144x512xf32, #tpu.memory_space<vmem>>, vector<16x512xf32>
    %75 = arith.addf %73, %74 : vector<16x512xf32>
    %76 = vector.extract_strided_slice %75 {offsets = [0, 0], sizes = [16, 128], strides = [1, 1]} : vector<16x512xf32> to vector<16x128xf32>
    %77 = arith.negf %76 : vector<16x128xf32>
    %78 = math.exp %77 : vector<16x128xf32>
    %cst_24 = arith.constant 1.000000e+00 : f32
    %79 = vector.broadcast %cst_24 : f32 to vector<16x128xf32>
    %80 = arith.addf %79, %78 : vector<16x128xf32>
    %81 = arith.divf %79, %80 : vector<16x128xf32>
    %82 = vector.extract_strided_slice %75 {offsets = [0, 128], sizes = [16, 128], strides = [1, 1]} : vector<16x512xf32> to vector<16x128xf32>
    %83 = arith.negf %82 : vector<16x128xf32>
    %84 = math.exp %83 : vector<16x128xf32>
    %cst_25 = arith.constant 1.000000e+00 : f32
    %85 = vector.broadcast %cst_25 : f32 to vector<16x128xf32>
    %86 = arith.addf %85, %84 : vector<16x128xf32>
    %87 = arith.divf %85, %86 : vector<16x128xf32>
    %88 = vector.extract_strided_slice %75 {offsets = [0, 256], sizes = [16, 128], strides = [1, 1]} : vector<16x512xf32> to vector<16x128xf32>
    %89 = math.tanh %88 : vector<16x128xf32>
    %90 = vector.extract_strided_slice %75 {offsets = [0, 384], sizes = [16, 128], strides = [1, 1]} : vector<16x512xf32> to vector<16x128xf32>
    %91 = arith.negf %90 : vector<16x128xf32>
    %92 = math.exp %91 : vector<16x128xf32>
    %cst_26 = arith.constant 1.000000e+00 : f32
    %93 = vector.broadcast %cst_26 : f32 to vector<16x128xf32>
    %94 = arith.addf %93, %92 : vector<16x128xf32>
    %95 = arith.divf %93, %94 : vector<16x128xf32>
    %96 = arith.mulf %87, %68 : vector<16x128xf32>
    %97 = arith.mulf %81, %89 : vector<16x128xf32>
    %98 = arith.addf %96, %97 : vector<16x128xf32>
    %99 = math.tanh %98 : vector<16x128xf32>
    %100 = arith.mulf %95, %99 : vector<16x128xf32>
    %101 = arith.truncf %100 : vector<16x128xf32> to vector<16x128xbf16>
    %c0_27 = arith.constant 0 : index
    %c0_28 = arith.constant 0 : index
    %102 = vector.load %arg3[%c0_27, %c0_28] : memref<128x512xbf16, #tpu.memory_space<vmem>>, vector<128x512xbf16>
    %cst_29 = arith.constant dense<0.000000e+00> : vector<16x512xf32>
    %103 = tpu.matmul %101, %102, %cst_29 {dimension_numbers = #tpu.dot_dimension_numbers<[1], [0], [0], [1], [0, 0, 1, 1], [], []>} : vector<16x128xbf16>, vector<128x512xbf16>, vector<16x512xf32> -> vector<16x512xf32>
    %c48 = arith.constant 48 : index
    %c0_30 = arith.constant 0 : index
    %104 = vector.load %arg7[%c48, %c0_30] : memref<144x512xf32, #tpu.memory_space<vmem>>, vector<16x512xf32>
    %105 = arith.addf %103, %104 : vector<16x512xf32>
    %106 = vector.extract_strided_slice %105 {offsets = [0, 0], sizes = [16, 128], strides = [1, 1]} : vector<16x512xf32> to vector<16x128xf32>
    %107 = arith.negf %106 : vector<16x128xf32>
    %108 = math.exp %107 : vector<16x128xf32>
    %cst_31 = arith.constant 1.000000e+00 : f32
    %109 = vector.broadcast %cst_31 : f32 to vector<16x128xf32>
    %110 = arith.addf %109, %108 : vector<16x128xf32>
    %111 = arith.divf %109, %110 : vector<16x128xf32>
    %112 = vector.extract_strided_slice %105 {offsets = [0, 128], sizes = [16, 128], strides = [1, 1]} : vector<16x512xf32> to vector<16x128xf32>
    %113 = arith.negf %112 : vector<16x128xf32>
    %114 = math.exp %113 : vector<16x128xf32>
    %cst_32 = arith.constant 1.000000e+00 : f32
    %115 = vector.broadcast %cst_32 : f32 to vector<16x128xf32>
    %116 = arith.addf %115, %114 : vector<16x128xf32>
    %117 = arith.divf %115, %116 : vector<16x128xf32>
    %118 = vector.extract_strided_slice %105 {offsets = [0, 256], sizes = [16, 128], strides = [1, 1]} : vector<16x512xf32> to vector<16x128xf32>
    %119 = math.tanh %118 : vector<16x128xf32>
    %120 = vector.extract_strided_slice %105 {offsets = [0, 384], sizes = [16, 128], strides = [1, 1]} : vector<16x512xf32> to vector<16x128xf32>
    %121 = arith.negf %120 : vector<16x128xf32>
    %122 = math.exp %121 : vector<16x128xf32>
    %cst_33 = arith.constant 1.000000e+00 : f32
    %123 = vector.broadcast %cst_33 : f32 to vector<16x128xf32>
    %124 = arith.addf %123, %122 : vector<16x128xf32>
    %125 = arith.divf %123, %124 : vector<16x128xf32>
    %126 = arith.mulf %117, %98 : vector<16x128xf32>
    %127 = arith.mulf %111, %119 : vector<16x128xf32>
    %128 = arith.addf %126, %127 : vector<16x128xf32>
    %129 = math.tanh %128 : vector<16x128xf32>
    %130 = arith.mulf %125, %129 : vector<16x128xf32>
    %131 = arith.truncf %130 : vector<16x128xf32> to vector<16x128xbf16>
    %c0_34 = arith.constant 0 : index
    %c0_35 = arith.constant 0 : index
    %132 = vector.load %arg3[%c0_34, %c0_35] : memref<128x512xbf16, #tpu.memory_space<vmem>>, vector<128x512xbf16>
    %cst_36 = arith.constant dense<0.000000e+00> : vector<16x512xf32>
    %133 = tpu.matmul %131, %132, %cst_36 {dimension_numbers = #tpu.dot_dimension_numbers<[1], [0], [0], [1], [0, 0, 1, 1], [], []>} : vector<16x128xbf16>, vector<128x512xbf16>, vector<16x512xf32> -> vector<16x512xf32>
    %c64 = arith.constant 64 : index
    %c0_37 = arith.constant 0 : index
    %134 = vector.load %arg7[%c64, %c0_37] : memref<144x512xf32, #tpu.memory_space<vmem>>, vector<16x512xf32>
    %135 = arith.addf %133, %134 : vector<16x512xf32>
    %136 = vector.extract_strided_slice %135 {offsets = [0, 0], sizes = [16, 128], strides = [1, 1]} : vector<16x512xf32> to vector<16x128xf32>
    %137 = arith.negf %136 : vector<16x128xf32>
    %138 = math.exp %137 : vector<16x128xf32>
    %cst_38 = arith.constant 1.000000e+00 : f32
    %139 = vector.broadcast %cst_38 : f32 to vector<16x128xf32>
    %140 = arith.addf %139, %138 : vector<16x128xf32>
    %141 = arith.divf %139, %140 : vector<16x128xf32>
    %142 = vector.extract_strided_slice %135 {offsets = [0, 128], sizes = [16, 128], strides = [1, 1]} : vector<16x512xf32> to vector<16x128xf32>
    %143 = arith.negf %142 : vector<16x128xf32>
    %144 = math.exp %143 : vector<16x128xf32>
    %cst_39 = arith.constant 1.000000e+00 : f32
    %145 = vector.broadcast %cst_39 : f32 to vector<16x128xf32>
    %146 = arith.addf %145, %144 : vector<16x128xf32>
    %147 = arith.divf %145, %146 : vector<16x128xf32>
    %148 = vector.extract_strided_slice %135 {offsets = [0, 256], sizes = [16, 128], strides = [1, 1]} : vector<16x512xf32> to vector<16x128xf32>
    %149 = math.tanh %148 : vector<16x128xf32>
    %150 = vector.extract_strided_slice %135 {offsets = [0, 384], sizes = [16, 128], strides = [1, 1]} : vector<16x512xf32> to vector<16x128xf32>
    %151 = arith.negf %150 : vector<16x128xf32>
    %152 = math.exp %151 : vector<16x128xf32>
    %cst_40 = arith.constant 1.000000e+00 : f32
    %153 = vector.broadcast %cst_40 : f32 to vector<16x128xf32>
    %154 = arith.addf %153, %152 : vector<16x128xf32>
    %155 = arith.divf %153, %154 : vector<16x128xf32>
    %156 = arith.mulf %147, %128 : vector<16x128xf32>
    %157 = arith.mulf %141, %149 : vector<16x128xf32>
    %158 = arith.addf %156, %157 : vector<16x128xf32>
    %159 = math.tanh %158 : vector<16x128xf32>
    %160 = arith.mulf %155, %159 : vector<16x128xf32>
    %161 = arith.truncf %160 : vector<16x128xf32> to vector<16x128xbf16>
    %c0_41 = arith.constant 0 : index
    %c0_42 = arith.constant 0 : index
    %162 = vector.load %arg3[%c0_41, %c0_42] : memref<128x512xbf16, #tpu.memory_space<vmem>>, vector<128x512xbf16>
    %cst_43 = arith.constant dense<0.000000e+00> : vector<16x512xf32>
    %163 = tpu.matmul %161, %162, %cst_43 {dimension_numbers = #tpu.dot_dimension_numbers<[1], [0], [0], [1], [0, 0, 1, 1], [], []>} : vector<16x128xbf16>, vector<128x512xbf16>, vector<16x512xf32> -> vector<16x512xf32>
    %c80 = arith.constant 80 : index
    %c0_44 = arith.constant 0 : index
    %164 = vector.load %arg7[%c80, %c0_44] : memref<144x512xf32, #tpu.memory_space<vmem>>, vector<16x512xf32>
    %165 = arith.addf %163, %164 : vector<16x512xf32>
    %166 = vector.extract_strided_slice %165 {offsets = [0, 0], sizes = [16, 128], strides = [1, 1]} : vector<16x512xf32> to vector<16x128xf32>
    %167 = arith.negf %166 : vector<16x128xf32>
    %168 = math.exp %167 : vector<16x128xf32>
    %cst_45 = arith.constant 1.000000e+00 : f32
    %169 = vector.broadcast %cst_45 : f32 to vector<16x128xf32>
    %170 = arith.addf %169, %168 : vector<16x128xf32>
    %171 = arith.divf %169, %170 : vector<16x128xf32>
    %172 = vector.extract_strided_slice %165 {offsets = [0, 128], sizes = [16, 128], strides = [1, 1]} : vector<16x512xf32> to vector<16x128xf32>
    %173 = arith.negf %172 : vector<16x128xf32>
    %174 = math.exp %173 : vector<16x128xf32>
    %cst_46 = arith.constant 1.000000e+00 : f32
    %175 = vector.broadcast %cst_46 : f32 to vector<16x128xf32>
    %176 = arith.addf %175, %174 : vector<16x128xf32>
    %177 = arith.divf %175, %176 : vector<16x128xf32>
    %178 = vector.extract_strided_slice %165 {offsets = [0, 256], sizes = [16, 128], strides = [1, 1]} : vector<16x512xf32> to vector<16x128xf32>
    %179 = math.tanh %178 : vector<16x128xf32>
    %180 = vector.extract_strided_slice %165 {offsets = [0, 384], sizes = [16, 128], strides = [1, 1]} : vector<16x512xf32> to vector<16x128xf32>
    %181 = arith.negf %180 : vector<16x128xf32>
    %182 = math.exp %181 : vector<16x128xf32>
    %cst_47 = arith.constant 1.000000e+00 : f32
    %183 = vector.broadcast %cst_47 : f32 to vector<16x128xf32>
    %184 = arith.addf %183, %182 : vector<16x128xf32>
    %185 = arith.divf %183, %184 : vector<16x128xf32>
    %186 = arith.mulf %177, %158 : vector<16x128xf32>
    %187 = arith.mulf %171, %179 : vector<16x128xf32>
    %188 = arith.addf %186, %187 : vector<16x128xf32>
    %189 = math.tanh %188 : vector<16x128xf32>
    %190 = arith.mulf %185, %189 : vector<16x128xf32>
    %191 = arith.truncf %190 : vector<16x128xf32> to vector<16x128xbf16>
    %c0_48 = arith.constant 0 : index
    %c0_49 = arith.constant 0 : index
    %192 = vector.load %arg3[%c0_48, %c0_49] : memref<128x512xbf16, #tpu.memory_space<vmem>>, vector<128x512xbf16>
    %cst_50 = arith.constant dense<0.000000e+00> : vector<16x512xf32>
    %193 = tpu.matmul %191, %192, %cst_50 {dimension_numbers = #tpu.dot_dimension_numbers<[1], [0], [0], [1], [0, 0, 1, 1], [], []>} : vector<16x128xbf16>, vector<128x512xbf16>, vector<16x512xf32> -> vector<16x512xf32>
    %c96 = arith.constant 96 : index
    %c0_51 = arith.constant 0 : index
    %194 = vector.load %arg7[%c96, %c0_51] : memref<144x512xf32, #tpu.memory_space<vmem>>, vector<16x512xf32>
    %195 = arith.addf %193, %194 : vector<16x512xf32>
    %196 = vector.extract_strided_slice %195 {offsets = [0, 0], sizes = [16, 128], strides = [1, 1]} : vector<16x512xf32> to vector<16x128xf32>
    %197 = arith.negf %196 : vector<16x128xf32>
    %198 = math.exp %197 : vector<16x128xf32>
    %cst_52 = arith.constant 1.000000e+00 : f32
    %199 = vector.broadcast %cst_52 : f32 to vector<16x128xf32>
    %200 = arith.addf %199, %198 : vector<16x128xf32>
    %201 = arith.divf %199, %200 : vector<16x128xf32>
    %202 = vector.extract_strided_slice %195 {offsets = [0, 128], sizes = [16, 128], strides = [1, 1]} : vector<16x512xf32> to vector<16x128xf32>
    %203 = arith.negf %202 : vector<16x128xf32>
    %204 = math.exp %203 : vector<16x128xf32>
    %cst_53 = arith.constant 1.000000e+00 : f32
    %205 = vector.broadcast %cst_53 : f32 to vector<16x128xf32>
    %206 = arith.addf %205, %204 : vector<16x128xf32>
    %207 = arith.divf %205, %206 : vector<16x128xf32>
    %208 = vector.extract_strided_slice %195 {offsets = [0, 256], sizes = [16, 128], strides = [1, 1]} : vector<16x512xf32> to vector<16x128xf32>
    %209 = math.tanh %208 : vector<16x128xf32>
    %210 = vector.extract_strided_slice %195 {offsets = [0, 384], sizes = [16, 128], strides = [1, 1]} : vector<16x512xf32> to vector<16x128xf32>
    %211 = arith.negf %210 : vector<16x128xf32>
    %212 = math.exp %211 : vector<16x128xf32>
    %cst_54 = arith.constant 1.000000e+00 : f32
    %213 = vector.broadcast %cst_54 : f32 to vector<16x128xf32>
    %214 = arith.addf %213, %212 : vector<16x128xf32>
    %215 = arith.divf %213, %214 : vector<16x128xf32>
    %216 = arith.mulf %207, %188 : vector<16x128xf32>
    %217 = arith.mulf %201, %209 : vector<16x128xf32>
    %218 = arith.addf %216, %217 : vector<16x128xf32>
    %219 = math.tanh %218 : vector<16x128xf32>
    %220 = arith.mulf %215, %219 : vector<16x128xf32>
    %221 = arith.truncf %220 : vector<16x128xf32> to vector<16x128xbf16>
    %c0_55 = arith.constant 0 : index
    %c0_56 = arith.constant 0 : index
    %222 = vector.load %arg3[%c0_55, %c0_56] : memref<128x512xbf16, #tpu.memory_space<vmem>>, vector<128x512xbf16>
    %cst_57 = arith.constant dense<0.000000e+00> : vector<16x512xf32>
    %223 = tpu.matmul %221, %222, %cst_57 {dimension_numbers = #tpu.dot_dimension_numbers<[1], [0], [0], [1], [0, 0, 1, 1], [], []>} : vector<16x128xbf16>, vector<128x512xbf16>, vector<16x512xf32> -> vector<16x512xf32>
    %c112 = arith.constant 112 : index
    %c0_58 = arith.constant 0 : index
    %224 = vector.load %arg7[%c112, %c0_58] : memref<144x512xf32, #tpu.memory_space<vmem>>, vector<16x512xf32>
    %225 = arith.addf %223, %224 : vector<16x512xf32>
    %226 = vector.extract_strided_slice %225 {offsets = [0, 0], sizes = [16, 128], strides = [1, 1]} : vector<16x512xf32> to vector<16x128xf32>
    %227 = arith.negf %226 : vector<16x128xf32>
    %228 = math.exp %227 : vector<16x128xf32>
    %cst_59 = arith.constant 1.000000e+00 : f32
    %229 = vector.broadcast %cst_59 : f32 to vector<16x128xf32>
    %230 = arith.addf %229, %228 : vector<16x128xf32>
    %231 = arith.divf %229, %230 : vector<16x128xf32>
    %232 = vector.extract_strided_slice %225 {offsets = [0, 128], sizes = [16, 128], strides = [1, 1]} : vector<16x512xf32> to vector<16x128xf32>
    %233 = arith.negf %232 : vector<16x128xf32>
    %234 = math.exp %233 : vector<16x128xf32>
    %cst_60 = arith.constant 1.000000e+00 : f32
    %235 = vector.broadcast %cst_60 : f32 to vector<16x128xf32>
    %236 = arith.addf %235, %234 : vector<16x128xf32>
    %237 = arith.divf %235, %236 : vector<16x128xf32>
    %238 = vector.extract_strided_slice %225 {offsets = [0, 256], sizes = [16, 128], strides = [1, 1]} : vector<16x512xf32> to vector<16x128xf32>
    %239 = math.tanh %238 : vector<16x128xf32>
    %240 = vector.extract_strided_slice %225 {offsets = [0, 384], sizes = [16, 128], strides = [1, 1]} : vector<16x512xf32> to vector<16x128xf32>
    %241 = arith.negf %240 : vector<16x128xf32>
    %242 = math.exp %241 : vector<16x128xf32>
    %cst_61 = arith.constant 1.000000e+00 : f32
    %243 = vector.broadcast %cst_61 : f32 to vector<16x128xf32>
    %244 = arith.addf %243, %242 : vector<16x128xf32>
    %245 = arith.divf %243, %244 : vector<16x128xf32>
    %246 = arith.mulf %237, %218 : vector<16x128xf32>
    %247 = arith.mulf %231, %239 : vector<16x128xf32>
    %248 = arith.addf %246, %247 : vector<16x128xf32>
    %249 = math.tanh %248 : vector<16x128xf32>
    %250 = arith.mulf %245, %249 : vector<16x128xf32>
    %251 = arith.truncf %250 : vector<16x128xf32> to vector<16x128xbf16>
    %c0_62 = arith.constant 0 : index
    %c0_63 = arith.constant 0 : index
    %252 = vector.load %arg3[%c0_62, %c0_63] : memref<128x512xbf16, #tpu.memory_space<vmem>>, vector<128x512xbf16>
    %cst_64 = arith.constant dense<0.000000e+00> : vector<16x512xf32>
    %253 = tpu.matmul %251, %252, %cst_64 {dimension_numbers = #tpu.dot_dimension_numbers<[1], [0], [0], [1], [0, 0, 1, 1], [], []>} : vector<16x128xbf16>, vector<128x512xbf16>, vector<16x512xf32> -> vector<16x512xf32>
    %c128 = arith.constant 128 : index
    %c0_65 = arith.constant 0 : index
    %254 = vector.load %arg7[%c128, %c0_65] : memref<144x512xf32, #tpu.memory_space<vmem>>, vector<16x512xf32>
    %255 = arith.addf %253, %254 : vector<16x512xf32>
    %256 = vector.extract_strided_slice %255 {offsets = [0, 0], sizes = [16, 128], strides = [1, 1]} : vector<16x512xf32> to vector<16x128xf32>
    %257 = arith.negf %256 : vector<16x128xf32>
    %258 = math.exp %257 : vector<16x128xf32>
    %cst_66 = arith.constant 1.000000e+00 : f32
    %259 = vector.broadcast %cst_66 : f32 to vector<16x128xf32>
    %260 = arith.addf %259, %258 : vector<16x128xf32>
    %261 = arith.divf %259, %260 : vector<16x128xf32>
    %262 = vector.extract_strided_slice %255 {offsets = [0, 128], sizes = [16, 128], strides = [1, 1]} : vector<16x512xf32> to vector<16x128xf32>
    %263 = arith.negf %262 : vector<16x128xf32>
    %264 = math.exp %263 : vector<16x128xf32>
    %cst_67 = arith.constant 1.000000e+00 : f32
    %265 = vector.broadcast %cst_67 : f32 to vector<16x128xf32>
    %266 = arith.addf %265, %264 : vector<16x128xf32>
    %267 = arith.divf %265, %266 : vector<16x128xf32>
    %268 = vector.extract_strided_slice %255 {offsets = [0, 256], sizes = [16, 128], strides = [1, 1]} : vector<16x512xf32> to vector<16x128xf32>
    %269 = math.tanh %268 : vector<16x128xf32>
    %270 = vector.extract_strided_slice %255 {offsets = [0, 384], sizes = [16, 128], strides = [1, 1]} : vector<16x512xf32> to vector<16x128xf32>
    %271 = arith.negf %270 : vector<16x128xf32>
    %272 = math.exp %271 : vector<16x128xf32>
    %cst_68 = arith.constant 1.000000e+00 : f32
    %273 = vector.broadcast %cst_68 : f32 to vector<16x128xf32>
    %274 = arith.addf %273, %272 : vector<16x128xf32>
    %275 = arith.divf %273, %274 : vector<16x128xf32>
    %276 = arith.mulf %267, %248 : vector<16x128xf32>
    %277 = arith.mulf %261, %269 : vector<16x128xf32>
    %278 = arith.addf %276, %277 : vector<16x128xf32>
    %279 = math.tanh %278 : vector<16x128xf32>
    %280 = arith.mulf %275, %279 : vector<16x128xf32>
    %281 = arith.truncf %280 : vector<16x128xf32> to vector<16x128xbf16>
    %c0_69 = arith.constant 0 : index
    %c0_70 = arith.constant 0 : index
    %282 = vector.load %arg4[%c0_69, %c0_70] : memref<128x128xbf16, #tpu.memory_space<vmem>>, vector<128x128xbf16>
    %cst_71 = arith.constant dense<0.000000e+00> : vector<16x128xf32>
    %283 = tpu.matmul %281, %282, %cst_71 {dimension_numbers = #tpu.dot_dimension_numbers<[1], [0], [0], [1], [0, 0, 1, 1], [], []>} : vector<16x128xbf16>, vector<128x128xbf16>, vector<16x128xf32> -> vector<16x128xf32>
    %c0_72 = arith.constant 0 : index
    %c0_73 = arith.constant 0 : index
    %284 = vector.load %arg5[%c0_72, %c0_73] : memref<1x128xf32, #tpu.memory_space<vmem>>, vector<1x128xf32>
    %285 = vector.broadcast %284 : vector<1x128xf32> to vector<16x128xf32>
    %286 = arith.addf %283, %285 : vector<16x128xf32>
    %c0_74 = arith.constant 0 : index
    %c0_75 = arith.constant 0 : index
    %287 = vector.load %arg6[%c0_74, %c0_75] : memref<16x128xf32, #tpu.memory_space<vmem>>, vector<16x128xf32>
    tpu.vector_store %arg6[%c0_74, %c0_75], %286 {strides = array<i32>} : memref<16x128xf32, #tpu.memory_space<vmem>>, vector<16x128xf32>,
    return
  }
}

</mosaic_0001>

<llo_original>
// kernel: tpu_custom_call.1
$region0: #{tpu_custom_call.1}
  #allocation0 [shape = 'u32[]', space=smem, size = 0x4, offset = 0x4, fixed_abs, tag = 'smem constant byte address 0x4 - core index']
  #allocation1 [shape = 'u32[144,128]{1,0:T(1,128)}', space=vmem, size = 0x12000, scoped, tag = 'internal scratch']
  #allocation2 [shape = 'f32[144,512]{1,0:T(8,128)}', space=vmem, size = 0x48000, scoped, tag = 'scratch operand']
  %s0 = inlined_call_operand.hbm [shape: bf16[144,128], index: 0, kind: input, shape index: {}]
  %s1 = inlined_call_operand.hbm [shape: bf16[128,512], index: 1, kind: input, shape index: {}]
  %s2 = inlined_call_operand.hbm [shape: f32[1,512], index: 2, kind: input, shape index: {}]
  %s3 = inlined_call_operand.hbm [shape: bf16[128,512], index: 3, kind: input, shape index: {}]
  %s4 = inlined_call_operand.hbm [shape: bf16[128,128], index: 4, kind: input, shape index: {}]
  %s5 = inlined_call_operand.vmem [shape: f32[1,128], index: 5, kind: input, shape index: {}]
  %s6 = inlined_call_operand.hbm [shape: f32[16,128], index: 6, kind: output, shape index: {}]
  %s7 = sld [smem:[#allocation0]]
  $region54: #{tpu_custom_call.1} parent=0
    _
  %s9 = ssub.s32 1, %s7
  %s10 = scalar_select 0, %s9, %s7
  $region1: #{tpu_custom_call.1} parent=0
    #allocation3 [shape = 'u8[36864]{0}', space=vmem, size = 0x9000, scoped, tag = 'input window, operand 0, single buffered']
    #allocation4 [shape = 's32[1]{0}', space=sflag, size = 0x4, scoped, tag = 'scoped memory for tpu_custom_call.1']
    #allocation5 [shape = 's32[1]{0}', space=sflag, size = 0x4, scoped, tag = 'scoped memory for tpu_custom_call.1']
    #allocation6 [shape = 'u8[131072]{0}', space=vmem, size = 0x20000, scoped, tag = 'input window, operand 1, single buffered']
    #allocation7 [shape = 's32[1]{0}', space=sflag, size = 0x4, scoped, tag = 'scoped memory for tpu_custom_call.1']
    #allocation8 [shape = 'u8[2048]{0}', space=vmem, size = 0x800, scoped, tag = 'input window, operand 2, single buffered']
    #allocation9 [shape = 'u8[131072]{0}', space=vmem, size = 0x20000, scoped, tag = 'input window, operand 3, single buffered']
    #allocation10 [shape = 's32[1]{0}', space=sflag, size = 0x4, scoped, tag = 'scoped memory for tpu_custom_call.1']
    #allocation11 [shape = 'u8[32768]{0}', space=vmem, size = 0x8000, scoped, tag = 'input window, operand 4, single buffered']
    #allocation12 [shape = 'u8[8192]{0}', space=vmem, size = 0x2000, scoped, tag = 'output window, operand 0, single buffered']
    %11 = vsyncpa [#allocation4], 0
    %12 = vsyncpa [#allocation7], 0
    %13 = vsyncpa [#allocation10], 0
    %14 = vsyncpa [#allocation5], 0
    // Predicated region
    $region2: #{tpu_custom_call.1} parent=1 // pred_check
      _
    $region3: #{tpu_custom_call.1} parent=1 // pred_check_branch
      %16 = sbr.rel (0) target = $region5
    $region4: #{tpu_custom_call.1} parent=1 // pred_region
      %s18 = ssub.s32 1152, 1152
      %19 = vsyncadd [#allocation4], %s18
      %s20 = sshll.u32 [#allocation3], 4
      %s21 = int_to_ptr.vmem [resolvable:$true] %s20
      %26 = dma.hbm_to_vmem [thread:$0]  %s0, 1152, %s21, [#allocation4], 64, 64, 4
    $region5: #{tpu_custom_call.1} parent=1 // pred_fallthru
      _
    // Predicated region
    $region6: #{tpu_custom_call.1} parent=1 // pred_check
      _
    $region7: #{tpu_custom_call.1} parent=1 // pred_check_branch
      %28 = sbr.rel (0) target = $region9
    $region8: #{tpu_custom_call.1} parent=1 // pred_region
      %s30 = ssub.s32 4096, 4096
      %31 = vsyncadd [#allocation7], %s30
      %s32 = sshll.u32 [#allocation6], 4
      %s33 = int_to_ptr.vmem [resolvable:$true] %s32
      %38 = dma.hbm_to_vmem [thread:$0]  %s1, 4096, %s33, [#allocation7], 256, 256, 16
    $region9: #{tpu_custom_call.1} parent=1 // pred_fallthru
      _
    // Predicated region
    $region10: #{tpu_custom_call.1} parent=1 // pred_check
      _
    $region11: #{tpu_custom_call.1} parent=1 // pred_check_branch
      %40 = sbr.rel (0) target = $region13
    $region12: #{tpu_custom_call.1} parent=1 // pred_region
      %s42 = ssub.s32 64, 64
      %43 = vsyncadd [#allocation7], %s42
      %s45 = sshll.u32 [#allocation8], 4
      %s46 = int_to_ptr.vmem [resolvable:$true] %s45
      %48 = dma.hbm_to_vmem [thread:$0]  %s2, 64, %s46, [#allocation7]
    $region13: #{tpu_custom_call.1} parent=1 // pred_fallthru
      _
    // Predicated region
    $region14: #{tpu_custom_call.1} parent=1 // pred_check
      _
    $region15: #{tpu_custom_call.1} parent=1 // pred_check_branch
      %50 = sbr.rel (0) target = $region17
    $region16: #{tpu_custom_call.1} parent=1 // pred_region
      %s52 = ssub.s32 4096, 4096
      %53 = vsyncadd [#allocation10], %s52
      %s54 = sshll.u32 [#allocation9], 4
      %s55 = int_to_ptr.vmem [resolvable:$true] %s54
      %60 = dma.hbm_to_vmem [thread:$0]  %s3, 4096, %s55, [#allocation10], 256, 256, 16
    $region17: #{tpu_custom_call.1} parent=1 // pred_fallthru
      _
    // Predicated region
    $region18: #{tpu_custom_call.1} parent=1 // pred_check
      _
    $region19: #{tpu_custom_call.1} parent=1 // pred_check_branch
      %62 = sbr.rel (0) target = $region21
    $region20: #{tpu_custom_call.1} parent=1 // pred_region
      %s64 = ssub.s32 1024, 1024
      %65 = vsyncadd [#allocation10], %s64
      %s66 = sshll.u32 [#allocation11], 4
      %s67 = int_to_ptr.vmem [resolvable:$true] %s66
      %72 = dma.hbm_to_vmem [thread:$0]  %s4, 1024, %s67, [#allocation10], 64, 64, 4
    $region21: #{tpu_custom_call.1} parent=1 // pred_fallthru
      _
    // Predicated region
    $region22: #{tpu_custom_call.1} parent=1 // pred_check
      _
    $region23: #{tpu_custom_call.1} parent=1 // pred_check_branch
      %74 = sbr.rel (0) target = $region25
    $region24: #{tpu_custom_call.1} parent=1 // pred_region
      _
    $region25: #{tpu_custom_call.1} parent=1 // pred_fallthru
      _
    // Predicated region
    $region26: #{tpu_custom_call.1} parent=1 // pred_check
      _
    $region27: #{tpu_custom_call.1} parent=1 // pred_check_branch
      %76 = sbr.rel (0) target = $region29
    $region28: #{tpu_custom_call.1} parent=1 // pred_region
      %77 = dma.done [#allocation4], 1152
    $region29: #{tpu_custom_call.1} parent=1 // pred_fallthru
      _
    // Predicated region
    $region30: #{tpu_custom_call.1} parent=1 // pred_check
      _
    $region31: #{tpu_custom_call.1} parent=1 // pred_check_branch
      %79 = sbr.rel (0) target = $region33
    $region32: #{tpu_custom_call.1} parent=1 // pred_region
      %80 = dma.done [#allocation7], 4096
    $region33: #{tpu_custom_call.1} parent=1 // pred_fallthru
      _
    // Predicated region
    $region34: #{tpu_custom_call.1} parent=1 // pred_check
      _
    $region35: #{tpu_custom_call.1} parent=1 // pred_check_branch
      %82 = sbr.rel (0) target = $region37
    $region36: #{tpu_custom_call.1} parent=1 // pred_region
      %83 = dma.done [#allocation7], 64
    $region37: #{tpu_custom_call.1} parent=1 // pred_fallthru
      _
    // Predicated region
    $region38: #{tpu_custom_call.1} parent=1 // pred_check
      _
    $region39: #{tpu_custom_call.1} parent=1 // pred_check_branch
      %85 = sbr.rel (0) target = $region41
    $region40: #{tpu_custom_call.1} parent=1 // pred_region
      %86 = dma.done [#allocation10], 4096
    $region41: #{tpu_custom_call.1} parent=1 // pred_fallthru
      _
    // Predicated region
    $region42: #{tpu_custom_call.1} parent=1 // pred_check
      _
    $region43: #{tpu_custom_call.1} parent=1 // pred_check_branch
      %88 = sbr.rel (0) target = $region45
    $region44: #{tpu_custom_call.1} parent=1 // pred_region
      %89 = dma.done [#allocation10], 1024
    $region45: #{tpu_custom_call.1} parent=1 // pred_fallthru
      _
    %v91 = vld [vmem:[#allocation3] sm:$0xf]
    %v92 = vld [vmem:[#allocation3 + $0x4] sm:$0xf]
    %v93 = vld [vmem:[#allocation3 + $0x8] sm:$0xf]
    %v94 = vld [vmem:[#allocation3 + $0xc] sm:$0xf]
    %v95 = vld [vmem:[#allocation3 + $0x10] sm:$0xf]
    %v96 = vld [vmem:[#allocation3 + $0x14] sm:$0xf]
    %v97 = vld [vmem:[#allocation3 + $0x18] sm:$0xf]
    %v98 = vld [vmem:[#allocation3 + $0x1c] sm:$0xf]
    %v99 = vld [vmem:[#allocation3 + $0x20] sm:$0xf]
    %v100 = vld [vmem:[#allocation3 + $0x24] sm:$0xf]
    %v101 = vld [vmem:[#allocation3 + $0x28] sm:$0xf]
    %v102 = vld [vmem:[#allocation3 + $0x2c] sm:$0xf]
    %v103 = vld [vmem:[#allocation3 + $0x30] sm:$0xf]
    %v104 = vld [vmem:[#allocation3 + $0x34] sm:$0xf]
    %v105 = vld [vmem:[#allocation3 + $0x38] sm:$0xf]
    %v106 = vld [vmem:[#allocation3 + $0x3c] sm:$0xf]
    %v107 = vld [vmem:[#allocation3 + $0x40] sm:$0xf]
    %v108 = vld [vmem:[#allocation3 + $0x44] sm:$0xf]
    %v109 = vld [vmem:[#allocation6] sm:$0xff]
    %v110 = vld [vmem:[#allocation6 + $0x8] sm:$0xff]
    %v111 = vld [vmem:[#allocation6 + $0x10] sm:$0xff]
    %v112 = vld [vmem:[#allocation6 + $0x18] sm:$0xff]
    %v113 = vld [vmem:[#allocation6 + $0x20] sm:$0xff]
    %v114 = vld [vmem:[#allocation6 + $0x28] sm:$0xff]
    %v115 = vld [vmem:[#allocation6 + $0x30] sm:$0xff]
    %v116 = vld [vmem:[#allocation6 + $0x38] sm:$0xff]
    %v117 = vld [vmem:[#allocation6 + $0x40] sm:$0xff]
    %v118 = vld [vmem:[#allocation6 + $0x48] sm:$0xff]
    %v119 = vld [vmem:[#allocation6 + $0x50] sm:$0xff]
    %v120 = vld [vmem:[#allocation6 + $0x58] sm:$0xff]
    %v121 = vld [vmem:[#allocation6 + $0x60] sm:$0xff]
    %v122 = vld [vmem:[#allocation6 + $0x68] sm:$0xff]
    %v123 = vld [vmem:[#allocation6 + $0x70] sm:$0xff]
    %v124 = vld [vmem:[#allocation6 + $0x78] sm:$0xff]
    %v125 = vld [vmem:[#allocation6 + $0x80] sm:$0xff]
    %v126 = vld [vmem:[#allocation6 + $0x88] sm:$0xff]
    %v127 = vld [vmem:[#allocation6 + $0x90] sm:$0xff]
    %v128 = vld [vmem:[#allocation6 + $0x98] sm:$0xff]
    %v129 = vld [vmem:[#allocation6 + $0xa0] sm:$0xff]
    %v130 = vld [vmem:[#allocation6 + $0xa8] sm:$0xff]
    %v131 = vld [vmem:[#allocation6 + $0xb0] sm:$0xff]
    %v132 = vld [vmem:[#allocation6 + $0xb8] sm:$0xff]
    %v133 = vld [vmem:[#allocation6 + $0xc0] sm:$0xff]
    %v134 = vld [vmem:[#allocation6 + $0xc8] sm:$0xff]
    %v135 = vld [vmem:[#allocation6 + $0xd0] sm:$0xff]
    %v136 = vld [vmem:[#allocation6 + $0xd8] sm:$0xff]
    %v137 = vld [vmem:[#allocation6 + $0xe0] sm:$0xff]
    %v138 = vld [vmem:[#allocation6 + $0xe8] sm:$0xff]
    %v139 = vld [vmem:[#allocation6 + $0xf0] sm:$0xff]
    %v140 = vld [vmem:[#allocation6 + $0xf8] sm:$0xff]
    %v141 = vld [vmem:[#allocation8] sm:$0xf]
    %v143 = vlaneseq
    %v144 = vshrl.u32 %v143, 7
    %v145 = vsub.s32 0, %v144
    %v146 = vrot.slane %v141, %v145
    %v147 = vlaneseq
    %v148 = vshrl.u32 %v147, 7
    %v149 = vsub.s32 1, %v148
    %v150 = vrot.slane %v141, %v149
    %v151 = vlaneseq
    %v152 = vshrl.u32 %v151, 7
    %v153 = vsub.s32 2, %v152
    %v154 = vrot.slane %v141, %v153
    %v155 = vlaneseq
    %v156 = vshrl.u32 %v155, 7
    %v157 = vsub.s32 3, %v156
    %v158 = vrot.slane %v141, %v157
    %v181 = vunpack.c.l.b16 %v91
    %v182 = vunpack.c.l.b16 %v92
    %v183 = vunpack.c.l.b16 %v93
    %v184 = vunpack.c.l.b16 %v94
    %v185 = vunpack.c.l.b16 %v95
    %v186 = vunpack.c.l.b16 %v96
    %v187 = vunpack.c.l.b16 %v97
    %v188 = vunpack.c.l.b16 %v98
    %v189 = vunpack.c.l.b16 %v99
    %v190 = vunpack.c.l.b16 %v100
    %v191 = vunpack.c.l.b16 %v101
    %v192 = vunpack.c.l.b16 %v102
    %v193 = vunpack.c.l.b16 %v103
    %v194 = vunpack.c.l.b16 %v104
    %v195 = vunpack.c.l.b16 %v105
    %v196 = vunpack.c.l.b16 %v106
    %v197 = vunpack.c.l.b16 %v107
    %v198 = vunpack.c.l.b16 %v108
    %v199 = vpack.c.b16 %v182, %v181
    %v200 = vpack.c.b16 %v184, %v183
    %v201 = vpack.c.b16 %v186, %v185
    %v202 = vpack.c.b16 %v188, %v187
    %v203 = vpack.c.b16 %v190, %v189
    %v204 = vpack.c.b16 %v192, %v191
    %v205 = vpack.c.b16 %v194, %v193
    %v206 = vpack.c.b16 %v196, %v195
    %v207 = vpack.c.b16 %v198, %v197
    %v249 = vunpack.c.l.b16 %v109
    %v250 = vunpack.c.h.b16 %v109
    %v251 = vunpack.c.l.b16 %v110
    %v252 = vunpack.c.h.b16 %v110
    %v253 = vunpack.c.l.b16 %v111
    %v254 = vunpack.c.h.b16 %v111
    %v255 = vunpack.c.l.b16 %v112
    %v256 = vunpack.c.h.b16 %v112
    %v257 = vunpack.c.l.b16 %v113
    %v258 = vunpack.c.h.b16 %v113
    %v259 = vunpack.c.l.b16 %v114
    %v260 = vunpack.c.h.b16 %v114
    %v261 = vunpack.c.l.b16 %v115
    %v262 = vunpack.c.h.b16 %v115
    %v263 = vunpack.c.l.b16 %v116
    %v264 = vunpack.c.h.b16 %v116
    %v265 = vunpack.c.l.b16 %v117
    %v266 = vunpack.c.h.b16 %v117
    %v267 = vunpack.c.l.b16 %v118
    %v268 = vunpack.c.h.b16 %v118
    %v269 = vunpack.c.l.b16 %v119
    %v270 = vunpack.c.h.b16 %v119
    %v271 = vunpack.c.l.b16 %v120
    %v272 = vunpack.c.h.b16 %v120
    %v273 = vunpack.c.l.b16 %v121
    %v274 = vunpack.c.h.b16 %v121
    %v275 = vunpack.c.l.b16 %v122
    %v276 = vunpack.c.h.b16 %v122
    %v277 = vunpack.c.l.b16 %v123
    %v278 = vunpack.c.h.b16 %v123
    %v279 = vunpack.c.l.b16 %v124
    %v280 = vunpack.c.h.b16 %v124
    %v281 = vunpack.c.l.b16 %v125
    %v282 = vunpack.c.h.b16 %v125
    %v283 = vunpack.c.l.b16 %v126
    %v284 = vunpack.c.h.b16 %v126
    %v285 = vunpack.c.l.b16 %v127
    %v286 = vunpack.c.h.b16 %v127
    %v287 = vunpack.c.l.b16 %v128
    %v288 = vunpack.c.h.b16 %v128
    %v289 = vunpack.c.l.b16 %v129
    %v290 = vunpack.c.h.b16 %v129
    %v291 = vunpack.c.l.b16 %v130
    %v292 = vunpack.c.h.b16 %v130
    %v293 = vunpack.c.l.b16 %v131
    %v294 = vunpack.c.h.b16 %v131
    %v295 = vunpack.c.l.b16 %v132
    %v296 = vunpack.c.h.b16 %v132
    %v297 = vunpack.c.l.b16 %v133
    %v298 = vunpack.c.h.b16 %v133
    %v299 = vunpack.c.l.b16 %v134
    %v300 = vunpack.c.h.b16 %v134
    %v301 = vunpack.c.l.b16 %v135
    %v302 = vunpack.c.h.b16 %v135
    %v303 = vunpack.c.l.b16 %v136
    %v304 = vunpack.c.h.b16 %v136
    %v305 = vunpack.c.l.b16 %v137
    %v306 = vunpack.c.h.b16 %v137
    %v307 = vunpack.c.l.b16 %v138
    %v308 = vunpack.c.h.b16 %v138
    %v309 = vunpack.c.l.b16 %v139
    %v310 = vunpack.c.h.b16 %v139
    %v311 = vunpack.c.l.b16 %v140
    %v312 = vunpack.c.h.b16 %v140
    %v313 = vpack.c.b16 %v253, %v249
    %v314 = vpack.c.b16 %v254, %v250
    %v315 = vpack.c.b16 %v255, %v251
    %v316 = vpack.c.b16 %v256, %v252
    %v317 = vpack.c.b16 %v261, %v257
    %v318 = vpack.c.b16 %v262, %v258
    %v319 = vpack.c.b16 %v263, %v259
    %v320 = vpack.c.b16 %v264, %v260
    %v321 = vpack.c.b16 %v269, %v265
    %v322 = vpack.c.b16 %v270, %v266
    %v323 = vpack.c.b16 %v271, %v267
    %v324 = vpack.c.b16 %v272, %v268
    %v325 = vpack.c.b16 %v277, %v273
    %v326 = vpack.c.b16 %v278, %v274
    %v327 = vpack.c.b16 %v279, %v275
    %v328 = vpack.c.b16 %v280, %v276
    %v329 = vpack.c.b16 %v285, %v281
    %v330 = vpack.c.b16 %v286, %v282
    %v331 = vpack.c.b16 %v287, %v283
    %v332 = vpack.c.b16 %v288, %v284
    %v333 = vpack.c.b16 %v293, %v289
    %v334 = vpack.c.b16 %v294, %v290
    %v335 = vpack.c.b16 %v295, %v291
    %v336 = vpack.c.b16 %v296, %v292
    %v337 = vpack.c.b16 %v301, %v297
    %v338 = vpack.c.b16 %v302, %v298
    %v339 = vpack.c.b16 %v303, %v299
    %v340 = vpack.c.b16 %v304, %v300
    %v341 = vpack.c.b16 %v309, %v305
    %v342 = vpack.c.b16 %v310, %v306
    %v343 = vpack.c.b16 %v311, %v307
    %v344 = vpack.c.b16 %v312, %v308
    %377 = vmatprep.subr.bf16.mxu0 %v342
    %378 = vmatpush1.bf16.msra.mxu0 %v341
    %379 = vmatprep.subr.bf16.mxu0 %v338
    %380 = vmatpush1.bf16.msra.mxu0 %v337
    %381 = vmatprep.subr.bf16.mxu0 %v334
    %382 = vmatpush1.bf16.msra.mxu0 %v333
    %383 = vmatprep.subr.bf16.mxu0 %v330
    %384 = vmatpush1.bf16.msra.mxu0 %v329
    %385 = vmatprep.subr.bf16.mxu0 %v326
    %386 = vmatpush1.bf16.msra.mxu0 %v325
    %387 = vmatprep.subr.bf16.mxu0 %v322
    %388 = vmatpush1.bf16.msra.mxu0 %v321
    %389 = vmatprep.subr.bf16.mxu0 %v318
    %390 = vmatpush1.bf16.msra.mxu0 %v317
    %391 = vmatprep.subr.bf16.mxu0 %v314
    %392 = vmatpush1.bf16.msra.mxu0 %v313
    %393 = vmatprep.subr.bf16.mxu0 0
    %394 = vmatpush2.bf16.msra.mxu0 0
    %395 = vmatprep.subr.bf16.mxu0 0
    %396 = vmatpush2.bf16.msra.mxu0 0
    %397 = vmatprep.subr.bf16.mxu0 0
    %398 = vmatpush2.bf16.msra.mxu0 0
    %399 = vmatprep.subr.bf16.mxu0 0
    %400 = vmatpush2.bf16.msra.mxu0 0
    %401 = vmatprep.subr.bf16.mxu0 0
    %402 = vmatpush2.bf16.msra.mxu0 0
    %403 = vmatprep.subr.bf16.mxu0 0
    %404 = vmatpush2.bf16.msra.mxu0 0
    %405 = vmatprep.subr.bf16.mxu0 0
    %406 = vmatpush2.bf16.msra.mxu0 0
    %407 = vmatprep.subr.bf16.mxu0 0
    %408 = vmatpush2.bf16.msra.mxu0 0
    %409 = vmatprep.mubr.bf16.mxu0 0
    %410 = vmatmul.mubr.bf16.gmra.mxu0 %v199
    %v411 = vpop.f32.mrf.mxu0
    %v412 = vadd.f32 %v146, %v411
    %v413 = vpop.f32.mrf.mxu0
    %v414 = vadd.f32 %v150, %v413
    %v415 = vpop.f32.mrf.mxu0
    %v416 = vadd.f32 %v146, %v415
    %v417 = vpop.f32.mrf.mxu0
    %v418 = vadd.f32 %v150, %v417
    %419 = vmatprep.mubr.bf16.mxu0 0
    %420 = vmatmul.mubr.bf16.gmra.mxu0 %v200
    %v421 = vpop.f32.mrf.mxu0
    %v422 = vadd.f32 %v146, %v421
    %v423 = vpop.f32.mrf.mxu0
    %v424 = vadd.f32 %v150, %v423
    %v425 = vpop.f32.mrf.mxu0
    %v426 = vadd.f32 %v146, %v425
    %v427 = vpop.f32.mrf.mxu0
    %v428 = vadd.f32 %v150, %v427
    %429 = vmatprep.mubr.bf16.mxu0 0
    %430 = vmatmul.mubr.bf16.gmra.mxu0 %v201
    %v431 = vpop.f32.mrf.mxu0
    %v432 = vadd.f32 %v146, %v431
    %v433 = vpop.f32.mrf.mxu0
    %v434 = vadd.f32 %v150, %v433
    %v435 = vpop.f32.mrf.mxu0
    %v436 = vadd.f32 %v146, %v435
    %v437 = vpop.f32.mrf.mxu0
    %v438 = vadd.f32 %v150, %v437
    %439 = vmatprep.mubr.bf16.mxu0 0
    %440 = vmatmul.mubr.bf16.gmra.mxu0 %v202
    %v441 = vpop.f32.mrf.mxu0
    %v442 = vadd.f32 %v146, %v441
    %v443 = vpop.f32.mrf.mxu0
    %v444 = vadd.f32 %v150, %v443
    %v445 = vpop.f32.mrf.mxu0
    %v446 = vadd.f32 %v146, %v445
    %v447 = vpop.f32.mrf.mxu0
    %v448 = vadd.f32 %v150, %v447
    %449 = vmatprep.mubr.bf16.mxu0 0
    %450 = vmatmul.mubr.bf16.gmra.mxu0 %v203
    %v451 = vpop.f32.mrf.mxu0
    %v452 = vadd.f32 %v146, %v451
    %v453 = vpop.f32.mrf.mxu0
    %v454 = vadd.f32 %v150, %v453
    %v455 = vpop.f32.mrf.mxu0
    %v456 = vadd.f32 %v146, %v455
    %v457 = vpop.f32.mrf.mxu0
    %v458 = vadd.f32 %v150, %v457
    %459 = vmatprep.mubr.bf16.mxu0 0
    %460 = vmatmul.mubr.bf16.gmra.mxu0 %v204
    %v461 = vpop.f32.mrf.mxu0
    %v462 = vadd.f32 %v146, %v461
    %v463 = vpop.f32.mrf.mxu0
    %v464 = vadd.f32 %v150, %v463
    %v465 = vpop.f32.mrf.mxu0
    %v466 = vadd.f32 %v146, %v465
    %v467 = vpop.f32.mrf.mxu0
    %v468 = vadd.f32 %v150, %v467
    %469 = vmatprep.mubr.bf16.mxu0 0
    %470 = vmatmul.mubr.bf16.gmra.mxu0 %v205
    %v471 = vpop.f32.mrf.mxu0
    %v472 = vadd.f32 %v146, %v471
    %v473 = vpop.f32.mrf.mxu0
    %v474 = vadd.f32 %v150, %v473
    %v475 = vpop.f32.mrf.mxu0
    %v476 = vadd.f32 %v146, %v475
    %v477 = vpop.f32.mrf.mxu0
    %v478 = vadd.f32 %v150, %v477
    %479 = vmatprep.mubr.bf16.mxu0 0
    %480 = vmatmul.mubr.bf16.gmra.mxu0 %v206
    %v481 = vpop.f32.mrf.mxu0
    %v482 = vadd.f32 %v146, %v481
    %v483 = vpop.f32.mrf.mxu0
    %v484 = vadd.f32 %v150, %v483
    %v485 = vpop.f32.mrf.mxu0
    %v486 = vadd.f32 %v146, %v485
    %v487 = vpop.f32.mrf.mxu0
    %v488 = vadd.f32 %v150, %v487
    %489 = vmatprep.mubr.bf16.mxu0 0
    %490 = vmatmul.mubr.bf16.gmra.mxu0 %v207
    %v491 = vpop.f32.mrf.mxu0
    %v492 = vadd.f32 %v146, %v491
    %v493 = vpop.f32.mrf.mxu0
    %v494 = vadd.f32 %v150, %v493
    %v495 = vpop.f32.mrf.mxu0
    %v496 = vadd.f32 %v146, %v495
    %v497 = vpop.f32.mrf.mxu0
    %v498 = vadd.f32 %v150, %v497
    %499 = vdwg.mxu0
    %500 = vmatprep.subr.bf16.mxu0 %v344
    %501 = vmatpush1.bf16.msra.mxu0 %v343
    %502 = vmatprep.subr.bf16.mxu0 %v340
    %503 = vmatpush1.bf16.msra.mxu0 %v339
    %504 = vmatprep.subr.bf16.mxu0 %v336
    %505 = vmatpush1.bf16.msra.mxu0 %v335
    %506 = vmatprep.subr.bf16.mxu0 %v332
    %507 = vmatpush1.bf16.msra.mxu0 %v331
    %508 = vmatprep.subr.bf16.mxu0 %v328
    %509 = vmatpush1.bf16.msra.mxu0 %v327
    %510 = vmatprep.subr.bf16.mxu0 %v324
    %511 = vmatpush1.bf16.msra.mxu0 %v323
    %512 = vmatprep.subr.bf16.mxu0 %v320
    %513 = vmatpush1.bf16.msra.mxu0 %v319
    %514 = vmatprep.subr.bf16.mxu0 %v316
    %515 = vmatpush1.bf16.msra.mxu0 %v315
    %516 = vmatprep.subr.bf16.mxu0 0
    %517 = vmatpush2.bf16.msra.mxu0 0
    %518 = vmatprep.subr.bf16.mxu0 0
    %519 = vmatpush2.bf16.msra.mxu0 0
    %520 = vmatprep.subr.bf16.mxu0 0
    %521 = vmatpush2.bf16.msra.mxu0 0
    %522 = vmatprep.subr.bf16.mxu0 0
    %523 = vmatpush2.bf16.msra.mxu0 0
    %524 = vmatprep.subr.bf16.mxu0 0
    %525 = vmatpush2.bf16.msra.mxu0 0
    %526 = vmatprep.subr.bf16.mxu0 0
    %527 = vmatpush2.bf16.msra.mxu0 0
    %528 = vmatprep.subr.bf16.mxu0 0
    %529 = vmatpush2.bf16.msra.mxu0 0
    %530 = vmatprep.subr.bf16.mxu0 0
    %531 = vmatpush2.bf16.msra.mxu0 0
    %532 = vmatprep.mubr.bf16.mxu0 0
    %533 = vmatmul.mubr.bf16.gmra.mxu0 %v199
    %v534 = vpop.f32.mrf.mxu0
    %v535 = vadd.f32 %v154, %v534
    %v536 = vpop.f32.mrf.mxu0
    %v537 = vadd.f32 %v158, %v536
    %v538 = vpop.f32.mrf.mxu0
    %v539 = vadd.f32 %v154, %v538
    %v540 = vpop.f32.mrf.mxu0
    %v541 = vadd.f32 %v158, %v540
    %542 = vmatprep.mubr.bf16.mxu0 0
    %543 = vmatmul.mubr.bf16.gmra.mxu0 %v200
    %v544 = vpop.f32.mrf.mxu0
    %v545 = vadd.f32 %v154, %v544
    %v546 = vpop.f32.mrf.mxu0
    %v547 = vadd.f32 %v158, %v546
    %v548 = vpop.f32.mrf.mxu0
    %v549 = vadd.f32 %v154, %v548
    %v550 = vpop.f32.mrf.mxu0
    %v551 = vadd.f32 %v158, %v550
    %552 = vmatprep.mubr.bf16.mxu0 0
    %553 = vmatmul.mubr.bf16.gmra.mxu0 %v201
    %v554 = vpop.f32.mrf.mxu0
    %v555 = vadd.f32 %v154, %v554
    %v556 = vpop.f32.mrf.mxu0
    %v557 = vadd.f32 %v158, %v556
    %v558 = vpop.f32.mrf.mxu0
    %v559 = vadd.f32 %v154, %v558
    %v560 = vpop.f32.mrf.mxu0
    %v561 = vadd.f32 %v158, %v560
    %562 = vmatprep.mubr.bf16.mxu0 0
    %563 = vmatmul.mubr.bf16.gmra.mxu0 %v202
    %v564 = vpop.f32.mrf.mxu0
    %v565 = vadd.f32 %v154, %v564
    %v566 = vpop.f32.mrf.mxu0
    %v567 = vadd.f32 %v158, %v566
    %v568 = vpop.f32.mrf.mxu0
    %v569 = vadd.f32 %v154, %v568
    %v570 = vpop.f32.mrf.mxu0
    %v571 = vadd.f32 %v158, %v570
    %572 = vmatprep.mubr.bf16.mxu0 0
    %573 = vmatmul.mubr.bf16.gmra.mxu0 %v203
    %v574 = vpop.f32.mrf.mxu0
    %v575 = vadd.f32 %v154, %v574
    %v576 = vpop.f32.mrf.mxu0
    %v577 = vadd.f32 %v158, %v576
    %v578 = vpop.f32.mrf.mxu0
    %v579 = vadd.f32 %v154, %v578
    %v580 = vpop.f32.mrf.mxu0
    %v581 = vadd.f32 %v158, %v580
    %582 = vmatprep.mubr.bf16.mxu0 0
    %583 = vmatmul.mubr.bf16.gmra.mxu0 %v204
    %v584 = vpop.f32.mrf.mxu0
    %v585 = vadd.f32 %v154, %v584
    %v586 = vpop.f32.mrf.mxu0
    %v587 = vadd.f32 %v158, %v586
    %v588 = vpop.f32.mrf.mxu0
    %v589 = vadd.f32 %v154, %v588
    %v590 = vpop.f32.mrf.mxu0
    %v591 = vadd.f32 %v158, %v590
    %592 = vmatprep.mubr.bf16.mxu0 0
    %593 = vmatmul.mubr.bf16.gmra.mxu0 %v205
    %v594 = vpop.f32.mrf.mxu0
    %v595 = vadd.f32 %v154, %v594
    %v596 = vpop.f32.mrf.mxu0
    %v597 = vadd.f32 %v158, %v596
    %v598 = vpop.f32.mrf.mxu0
    %v599 = vadd.f32 %v154, %v598
    %v600 = vpop.f32.mrf.mxu0
    %v601 = vadd.f32 %v158, %v600
    %602 = vmatprep.mubr.bf16.mxu0 0
    %603 = vmatmul.mubr.bf16.gmra.mxu0 %v206
    %v604 = vpop.f32.mrf.mxu0
    %v605 = vadd.f32 %v154, %v604
    %v606 = vpop.f32.mrf.mxu0
    %v607 = vadd.f32 %v158, %v606
    %v608 = vpop.f32.mrf.mxu0
    %v609 = vadd.f32 %v154, %v608
    %v610 = vpop.f32.mrf.mxu0
    %v611 = vadd.f32 %v158, %v610
    %612 = vmatprep.mubr.bf16.mxu0 0
    %613 = vmatmul.mubr.bf16.gmra.mxu0 %v207
    %v614 = vpop.f32.mrf.mxu0
    %v615 = vadd.f32 %v154, %v614
    %v616 = vpop.f32.mrf.mxu0
    %v617 = vadd.f32 %v158, %v616
    %v618 = vpop.f32.mrf.mxu0
    %v619 = vadd.f32 %v154, %v618
    %v620 = vpop.f32.mrf.mxu0
    %v621 = vadd.f32 %v158, %v620
    %622 = vdwg.mxu0
    %623 = vst [vmem:[#allocation2] sm:$0xff] %v412
    %624 = vst [vmem:[#allocation2 + $0x8] sm:$0xff] %v414
    %625 = vst [vmem:[#allocation2 + $0x10] sm:$0xff] %v535
    %626 = vst [vmem:[#allocation2 + $0x18] sm:$0xff] %v537
    %627 = vst [vmem:[#allocation2 + $0x20] sm:$0xff] %v416
    %628 = vst [vmem:[#allocation2 + $0x28] sm:$0xff] %v418
    %629 = vst [vmem:[#allocation2 + $0x30] sm:$0xff] %v539
    %630 = vst [vmem:[#allocation2 + $0x38] sm:$0xff] %v541
    %631 = vst [vmem:[#allocation2 + $0x40] sm:$0xff] %v422
    %632 = vst [vmem:[#allocation2 + $0x48] sm:$0xff] %v424
    %633 = vst [vmem:[#allocation2 + $0x50] sm:$0xff] %v545
    %634 = vst [vmem:[#allocation2 + $0x58] sm:$0xff] %v547
    %635 = vst [vmem:[#allocation2 + $0x60] sm:$0xff] %v426
    %636 = vst [vmem:[#allocation2 + $0x68] sm:$0xff] %v428
    %637 = vst [vmem:[#allocation2 + $0x70] sm:$0xff] %v549
    %638 = vst [vmem:[#allocation2 + $0x78] sm:$0xff] %v551
    %639 = vst [vmem:[#allocation2 + $0x80] sm:$0xff] %v432
    %640 = vst [vmem:[#allocation2 + $0x88] sm:$0xff] %v434
    %641 = vst [vmem:[#allocation2 + $0x90] sm:$0xff] %v555
    %642 = vst [vmem:[#allocation2 + $0x98] sm:$0xff] %v557
    %643 = vst [vmem:[#allocation2 + $0xa0] sm:$0xff] %v436
    %644 = vst [vmem:[#allocation2 + $0xa8] sm:$0xff] %v438
    %645 = vst [vmem:[#allocation2 + $0xb0] sm:$0xff] %v559
    %646 = vst [vmem:[#allocation2 + $0xb8] sm:$0xff] %v561
    %647 = vst [vmem:[#allocation2 + $0xc0] sm:$0xff] %v442
    %648 = vst [vmem:[#allocation2 + $0xc8] sm:$0xff] %v444
    %649 = vst [vmem:[#allocation2 + $0xd0] sm:$0xff] %v565
    %650 = vst [vmem:[#allocation2 + $0xd8] sm:$0xff] %v567
    %651 = vst [vmem:[#allocation2 + $0xe0] sm:$0xff] %v446
    %652 = vst [vmem:[#allocation2 + $0xe8] sm:$0xff] %v448
    %653 = vst [vmem:[#allocation2 + $0xf0] sm:$0xff] %v569
    %654 = vst [vmem:[#allocation2 + $0xf8] sm:$0xff] %v571
    %655 = vst [vmem:[#allocation2 + $0x100] sm:$0xff] %v452
    %656 = vst [vmem:[#allocation2 + $0x108] sm:$0xff] %v454
    %657 = vst [vmem:[#allocation2 + $0x110] sm:$0xff] %v575
    %658 = vst [vmem:[#allocation2 + $0x118] sm:$0xff] %v577
    %659 = vst [vmem:[#allocation2 + $0x120] sm:$0xff] %v456
    %660 = vst [vmem:[#allocation2 + $0x128] sm:$0xff] %v458
    %661 = vst [vmem:[#allocation2 + $0x130] sm:$0xff] %v579
    %662 = vst [vmem:[#allocation2 + $0x138] sm:$0xff] %v581
    %663 = vst [vmem:[#allocation2 + $0x140] sm:$0xff] %v462
    %664 = vst [vmem:[#allocation2 + $0x148] sm:$0xff] %v464
    %665 = vst [vmem:[#allocation2 + $0x150] sm:$0xff] %v585
    %666 = vst [vmem:[#allocation2 + $0x158] sm:$0xff] %v587
    %667 = vst [vmem:[#allocation2 + $0x160] sm:$0xff] %v466
    %668 = vst [vmem:[#allocation2 + $0x168] sm:$0xff] %v468
    %669 = vst [vmem:[#allocation2 + $0x170] sm:$0xff] %v589
    %670 = vst [vmem:[#allocation2 + $0x178] sm:$0xff] %v591
    %671 = vst [vmem:[#allocation2 + $0x180] sm:$0xff] %v472
    %672 = vst [vmem:[#allocation2 + $0x188] sm:$0xff] %v474
    %673 = vst [vmem:[#allocation2 + $0x190] sm:$0xff] %v595
    %674 = vst [vmem:[#allocation2 + $0x198] sm:$0xff] %v597
    %675 = vst [vmem:[#allocation2 + $0x1a0] sm:$0xff] %v476
    %676 = vst [vmem:[#allocation2 + $0x1a8] sm:$0xff] %v478
    %677 = vst [vmem:[#allocation2 + $0x1b0] sm:$0xff] %v599
    %678 = vst [vmem:[#allocation2 + $0x1b8] sm:$0xff] %v601
    %679 = vst [vmem:[#allocation2 + $0x1c0] sm:$0xff] %v482
    %680 = vst [vmem:[#allocation2 + $0x1c8] sm:$0xff] %v484
    %681 = vst [vmem:[#allocation2 + $0x1d0] sm:$0xff] %v605
    %682 = vst [vmem:[#allocation2 + $0x1d8] sm:$0xff] %v607
    %683 = vst [vmem:[#allocation2 + $0x1e0] sm:$0xff] %v486
    %684 = vst [vmem:[#allocation2 + $0x1e8] sm:$0xff] %v488
    %685 = vst [vmem:[#allocation2 + $0x1f0] sm:$0xff] %v609
    %686 = vst [vmem:[#allocation2 + $0x1f8] sm:$0xff] %v611
    %687 = vst [vmem:[#allocation2 + $0x200] sm:$0xff] %v492
    %688 = vst [vmem:[#allocation2 + $0x208] sm:$0xff] %v494
    %689 = vst [vmem:[#allocation2 + $0x210] sm:$0xff] %v615
    %690 = vst [vmem:[#allocation2 + $0x218] sm:$0xff] %v617
    %691 = vst [vmem:[#allocation2 + $0x220] sm:$0xff] %v496
    %692 = vst [vmem:[#allocation2 + $0x228] sm:$0xff] %v498
    %693 = vst [vmem:[#allocation2 + $0x230] sm:$0xff] %v619
    %694 = vst [vmem:[#allocation2 + $0x238] sm:$0xff] %v621
    %v695 = vld [vmem:[#allocation2] sm:$0xff]
    %v696 = vld [vmem:[#allocation2 + $0x8] sm:$0xff]
    %v697 = vld [vmem:[#allocation2 + $0x10] sm:$0xff]
    %v698 = vld [vmem:[#allocation2 + $0x18] sm:$0xff]
    %v699 = vld [vmem:[#allocation2 + $0x20] sm:$0xff]
    %v700 = vld [vmem:[#allocation2 + $0x28] sm:$0xff]
    %v701 = vld [vmem:[#allocation2 + $0x30] sm:$0xff]
    %v702 = vld [vmem:[#allocation2 + $0x38] sm:$0xff]
    %v703 = vxor.u32 %v695, 2147483648
    %v704 = vxor.u32 %v699, 2147483648
    %v705 = vmul.f32 %v703, 1.442695
    %v706 = vpow.pop %v705
    %v707 = vmul.f32 %v704, 1.442695
    %v708 = vpow.pop %v707
    %v709 = vadd.f32 %v706, 1.0
    %v710 = vadd.f32 %v708, 1.0
    %v711 = vrcp.pop %v709
    %v712 = vmul.f32 1.0, %v711
    %v713 = vrcp.pop %v710
    %v714 = vmul.f32 1.0, %v713
    %v715 = vxor.u32 %v696, 2147483648
    %v716 = vxor.u32 %v700, 2147483648
    %v717 = vmul.f32 %v715, 1.442695
    %v718 = vpow.pop %v717
    %v719 = vmul.f32 %v716, 1.442695
    %v720 = vpow.pop %v719
    %v721 = vadd.f32 %v718, 1.0
    %v722 = vadd.f32 %v720, 1.0
    %v723 = vrcp.pop %v721
    %v724 = vmul.f32 1.0, %v723
    %v725 = vrcp.pop %v722
    %v726 = vmul.f32 1.0, %v725
    %v727 = vtanh.pop %v697
    %v728 = vtanh.pop %v701
    %v729 = vxor.u32 %v698, 2147483648
    %v730 = vxor.u32 %v702, 2147483648
    %v731 = vmul.f32 %v729, 1.442695
    %v732 = vpow.pop %v731
    %v733 = vmul.f32 %v730, 1.442695
    %v734 = vpow.pop %v733
    %v735 = vadd.f32 %v732, 1.0
    %v736 = vadd.f32 %v734, 1.0
    %v737 = vrcp.pop %v735
    %v738 = vmul.f32 1.0, %v737
    %v739 = vrcp.pop %v736
    %v740 = vmul.f32 1.0, %v739
    %v741 = vmul.f32 %v724, 0.0
    %v742 = vmul.f32 %v726, 0.0
    %v743 = vmul.f32 %v712, %v727
    %v744 = vmul.f32 %v714, %v728
    %v745 = vadd.f32 %v741, %v743
    %v746 = vadd.f32 %v742, %v744
    %v747 = vtanh.pop %v745
    %v748 = vtanh.pop %v746
    %v749 = vmul.f32 %v738, %v747
    %v750 = vmul.f32 %v740, %v748
    %v751 = vlaneseq
    %v752 = vand.u32 %v751, 127
    %vm753 = vcmp.lt.s32.totalorder %v752, 64
    %v754 = vsel %vm753, 1, 0
    %v755 = vcvt.s32.f32 %v754
    %v756 = vmul.f32 %v749, %v755
    %v757 = vmul.f32 %v750, %v755
    %v758 = vmul.f32 %v745, %v755
    %v759 = vmul.f32 %v746, %v755
    %v760 = vpack.c.bf16 %v757, %v756
    %v761 = vld [vmem:[#allocation9] sm:$0xff]
    %v762 = vld [vmem:[#allocation9 + $0x8] sm:$0xff]
    %v763 = vld [vmem:[#allocation9 + $0x10] sm:$0xff]
    %v764 = vld [vmem:[#allocation9 + $0x18] sm:$0xff]
    %v765 = vld [vmem:[#allocation9 + $0x20] sm:$0xff]
    %v766 = vld [vmem:[#allocation9 + $0x28] sm:$0xff]
    %v767 = vld [vmem:[#allocation9 + $0x30] sm:$0xff]
    %v768 = vld [vmem:[#allocation9 + $0x38] sm:$0xff]
    %v769 = vld [vmem:[#allocation9 + $0x40] sm:$0xff]
    %v770 = vld [vmem:[#allocation9 + $0x48] sm:$0xff]
    %v771 = vld [vmem:[#allocation9 + $0x50] sm:$0xff]
    %v772 = vld [vmem:[#allocation9 + $0x58] sm:$0xff]
    %v773 = vld [vmem:[#allocation9 + $0x60] sm:$0xff]
    %v774 = vld [vmem:[#allocation9 + $0x68] sm:$0xff]
    %v775 = vld [vmem:[#allocation9 + $0x70] sm:$0xff]
    %v776 = vld [vmem:[#allocation9 + $0x78] sm:$0xff]
    %v777 = vld [vmem:[#allocation9 + $0x80] sm:$0xff]
    %v778 = vld [vmem:[#allocation9 + $0x88] sm:$0xff]
    %v779 = vld [vmem:[#allocation9 + $0x90] sm:$0xff]
    %v780 = vld [vmem:[#allocation9 + $0x98] sm:$0xff]
    %v781 = vld [vmem:[#allocation9 + $0xa0] sm:$0xff]
    %v782 = vld [vmem:[#allocation9 + $0xa8] sm:$0xff]
    %v783 = vld [vmem:[#allocation9 + $0xb0] sm:$0xff]
    %v784 = vld [vmem:[#allocation9 + $0xb8] sm:$0xff]
    %v785 = vld [vmem:[#allocation9 + $0xc0] sm:$0xff]
    %v786 = vld [vmem:[#allocation9 + $0xc8] sm:$0xff]
    %v787 = vld [vmem:[#allocation9 + $0xd0] sm:$0xff]
    %v788 = vld [vmem:[#allocation9 + $0xd8] sm:$0xff]
    %v789 = vld [vmem:[#allocation9 + $0xe0] sm:$0xff]
    %v790 = vld [vmem:[#allocation9 + $0xe8] sm:$0xff]
    %v791 = vld [vmem:[#allocation9 + $0xf0] sm:$0xff]
    %v792 = vld [vmem:[#allocation9 + $0xf8] sm:$0xff]
    %v793 = vld [vmem:[#allocation2 + $0x40] sm:$0xff]
    %v794 = vld [vmem:[#allocation2 + $0x48] sm:$0xff]
    %v795 = vld [vmem:[#allocation2 + $0x50] sm:$0xff]
    %v796 = vld [vmem:[#allocation2 + $0x58] sm:$0xff]
    %v797 = vld [vmem:[#allocation2 + $0x60] sm:$0xff]
    %v798 = vld [vmem:[#allocation2 + $0x68] sm:$0xff]
    %v799 = vld [vmem:[#allocation2 + $0x70] sm:$0xff]
    %v800 = vld [vmem:[#allocation2 + $0x78] sm:$0xff]
    %v833 = vunpack.c.l.b16 %v761
    %v834 = vunpack.c.h.b16 %v761
    %v835 = vunpack.c.l.b16 %v762
    %v836 = vunpack.c.h.b16 %v762
    %v837 = vunpack.c.l.b16 %v763
    %v838 = vunpack.c.h.b16 %v763
    %v839 = vunpack.c.l.b16 %v764
    %v840 = vunpack.c.h.b16 %v764
    %v841 = vunpack.c.l.b16 %v765
    %v842 = vunpack.c.h.b16 %v765
    %v843 = vunpack.c.l.b16 %v766
    %v844 = vunpack.c.h.b16 %v766
    %v845 = vunpack.c.l.b16 %v767
    %v846 = vunpack.c.h.b16 %v767
    %v847 = vunpack.c.l.b16 %v768
    %v848 = vunpack.c.h.b16 %v768
    %v849 = vunpack.c.l.b16 %v769
    %v850 = vunpack.c.h.b16 %v769
    %v851 = vunpack.c.l.b16 %v770
    %v852 = vunpack.c.h.b16 %v770
    %v853 = vunpack.c.l.b16 %v771
    %v854 = vunpack.c.h.b16 %v771
    %v855 = vunpack.c.l.b16 %v772
    %v856 = vunpack.c.h.b16 %v772
    %v857 = vunpack.c.l.b16 %v773
    %v858 = vunpack.c.h.b16 %v773
    %v859 = vunpack.c.l.b16 %v774
    %v860 = vunpack.c.h.b16 %v774
    %v861 = vunpack.c.l.b16 %v775
    %v862 = vunpack.c.h.b16 %v775
    %v863 = vunpack.c.l.b16 %v776
    %v864 = vunpack.c.h.b16 %v776
    %v865 = vunpack.c.l.b16 %v777
    %v866 = vunpack.c.h.b16 %v777
    %v867 = vunpack.c.l.b16 %v778
    %v868 = vunpack.c.h.b16 %v778
    %v869 = vunpack.c.l.b16 %v779
    %v870 = vunpack.c.h.b16 %v779
    %v871 = vunpack.c.l.b16 %v780
    %v872 = vunpack.c.h.b16 %v780
    %v873 = vunpack.c.l.b16 %v781
    %v874 = vunpack.c.h.b16 %v781
    %v875 = vunpack.c.l.b16 %v782
    %v876 = vunpack.c.h.b16 %v782
    %v877 = vunpack.c.l.b16 %v783
    %v878 = vunpack.c.h.b16 %v783
    %v879 = vunpack.c.l.b16 %v784
    %v880 = vunpack.c.h.b16 %v784
    %v881 = vunpack.c.l.b16 %v785
    %v882 = vunpack.c.h.b16 %v785
    %v883 = vunpack.c.l.b16 %v786
    %v884 = vunpack.c.h.b16 %v786
    %v885 = vunpack.c.l.b16 %v787
    %v886 = vunpack.c.h.b16 %v787
    %v887 = vunpack.c.l.b16 %v788
    %v888 = vunpack.c.h.b16 %v788
    %v889 = vunpack.c.l.b16 %v789
    %v890 = vunpack.c.h.b16 %v789
    %v891 = vunpack.c.l.b16 %v790
    %v892 = vunpack.c.h.b16 %v790
    %v893 = vunpack.c.l.b16 %v791
    %v894 = vunpack.c.h.b16 %v791
    %v895 = vunpack.c.l.b16 %v792
    %v896 = vunpack.c.h.b16 %v792
    %v897 = vpack.c.b16 %v837, %v833
    %v898 = vpack.c.b16 %v838, %v834
    %v899 = vpack.c.b16 %v839, %v835
    %v900 = vpack.c.b16 %v840, %v836
    %v901 = vpack.c.b16 %v845, %v841
    %v902 = vpack.c.b16 %v846, %v842
    %v903 = vpack.c.b16 %v847, %v843
    %v904 = vpack.c.b16 %v848, %v844
    %v905 = vpack.c.b16 %v853, %v849
    %v906 = vpack.c.b16 %v854, %v850
    %v907 = vpack.c.b16 %v855, %v851
    %v908 = vpack.c.b16 %v856, %v852
    %v909 = vpack.c.b16 %v861, %v857
    %v910 = vpack.c.b16 %v862, %v858
    %v911 = vpack.c.b16 %v863, %v859
    %v912 = vpack.c.b16 %v864, %v860
    %v913 = vpack.c.b16 %v869, %v865
    %v914 = vpack.c.b16 %v870, %v866
    %v915 = vpack.c.b16 %v871, %v867
    %v916 = vpack.c.b16 %v872, %v868
    %v917 = vpack.c.b16 %v877, %v873
    %v918 = vpack.c.b16 %v878, %v874
    %v919 = vpack.c.b16 %v879, %v875
    %v920 = vpack.c.b16 %v880, %v876
    %v921 = vpack.c.b16 %v885, %v881
    %v922 = vpack.c.b16 %v886, %v882
    %v923 = vpack.c.b16 %v887, %v883
    %v924 = vpack.c.b16 %v888, %v884
    %v925 = vpack.c.b16 %v893, %v889
    %v926 = vpack.c.b16 %v894, %v890
    %v927 = vpack.c.b16 %v895, %v891
    %v928 = vpack.c.b16 %v896, %v892
    %961 = vmatprep.subr.bf16.mxu0 %v926
    %962 = vmatpush1.bf16.msra.mxu0 %v925
    %963 = vmatprep.subr.bf16.mxu0 %v922
    %964 = vmatpush1.bf16.msra.mxu0 %v921
    %965 = vmatprep.subr.bf16.mxu0 %v918
    %966 = vmatpush1.bf16.msra.mxu0 %v917
    %967 = vmatprep.subr.bf16.mxu0 %v914
    %968 = vmatpush1.bf16.msra.mxu0 %v913
    %969 = vmatprep.subr.bf16.mxu0 %v910
    %970 = vmatpush1.bf16.msra.mxu0 %v909
    %971 = vmatprep.subr.bf16.mxu0 %v906
    %972 = vmatpush1.bf16.msra.mxu0 %v905
    %973 = vmatprep.subr.bf16.mxu0 %v902
    %974 = vmatpush1.bf16.msra.mxu0 %v901
    %975 = vmatprep.subr.bf16.mxu0 %v898
    %976 = vmatpush1.bf16.msra.mxu0 %v897
    %977 = vmatprep.subr.bf16.mxu0 0
    %978 = vmatpush2.bf16.msra.mxu0 0
    %979 = vmatprep.subr.bf16.mxu0 0
    %980 = vmatpush2.bf16.msra.mxu0 0
    %981 = vmatprep.subr.bf16.mxu0 0
    %982 = vmatpush2.bf16.msra.mxu0 0
    %983 = vmatprep.subr.bf16.mxu0 0
    %984 = vmatpush2.bf16.msra.mxu0 0
    %985 = vmatprep.subr.bf16.mxu0 0
    %986 = vmatpush2.bf16.msra.mxu0 0
    %987 = vmatprep.subr.bf16.mxu0 0
    %988 = vmatpush2.bf16.msra.mxu0 0
    %989 = vmatprep.subr.bf16.mxu0 0
    %990 = vmatpush2.bf16.msra.mxu0 0
    %991 = vmatprep.subr.bf16.mxu0 0
    %992 = vmatpush2.bf16.msra.mxu0 0
    %993 = vmatprep.mubr.bf16.mxu0 0
    %994 = vmatmul.mubr.bf16.gmra.mxu0 %v760
    %v995 = vpop.f32.mrf.mxu0
    %v996 = vadd.f32 %v793, %v995
    %v997 = vpop.f32.mrf.mxu0
    %v998 = vadd.f32 %v794, %v997
    %v999 = vpop.f32.mrf.mxu0
    %v1000 = vadd.f32 %v797, %v999
    %v1001 = vpop.f32.mrf.mxu0
    %v1002 = vadd.f32 %v798, %v1001
    %1003 = vdwg.mxu0
    %1004 = vmatprep.subr.bf16.mxu0 %v928
    %1005 = vmatpush1.bf16.msra.mxu0 %v927
    %1006 = vmatprep.subr.bf16.mxu0 %v924
    %1007 = vmatpush1.bf16.msra.mxu0 %v923
    %1008 = vmatprep.subr.bf16.mxu0 %v920
    %1009 = vmatpush1.bf16.msra.mxu0 %v919
    %1010 = vmatprep.subr.bf16.mxu0 %v916
    %1011 = vmatpush1.bf16.msra.mxu0 %v915
    %1012 = vmatprep.subr.bf16.mxu0 %v912
    %1013 = vmatpush1.bf16.msra.mxu0 %v911
    %1014 = vmatprep.subr.bf16.mxu0 %v908
    %1015 = vmatpush1.bf16.msra.mxu0 %v907
    %1016 = vmatprep.subr.bf16.mxu0 %v904
    %1017 = vmatpush1.bf16.msra.mxu0 %v903
    %1018 = vmatprep.subr.bf16.mxu0 %v900
    %1019 = vmatpush1.bf16.msra.mxu0 %v899
    %1020 = vmatprep.subr.bf16.mxu0 0
    %1021 = vmatpush2.bf16.msra.mxu0 0
    %1022 = vmatprep.subr.bf16.mxu0 0
    %1023 = vmatpush2.bf16.msra.mxu0 0
    %1024 = vmatprep.subr.bf16.mxu0 0
    %1025 = vmatpush2.bf16.msra.mxu0 0
    %1026 = vmatprep.subr.bf16.mxu0 0
    %1027 = vmatpush2.bf16.msra.mxu0 0
    %1028 = vmatprep.subr.bf16.mxu0 0
    %1029 = vmatpush2.bf16.msra.mxu0 0
    %1030 = vmatprep.subr.bf16.mxu0 0
    %1031 = vmatpush2.bf16.msra.mxu0 0
    %1032 = vmatprep.subr.bf16.mxu0 0
    %1033 = vmatpush2.bf16.msra.mxu0 0
    %1034 = vmatprep.subr.bf16.mxu0 0
    %1035 = vmatpush2.bf16.msra.mxu0 0
    %1036 = vmatprep.mubr.bf16.mxu0 0
    %1037 = vmatmul.mubr.bf16.gmra.mxu0 %v760
    %v1038 = vpop.f32.mrf.mxu0
    %v1039 = vadd.f32 %v795, %v1038
    %v1040 = vpop.f32.mrf.mxu0
    %v1041 = vadd.f32 %v796, %v1040
    %v1042 = vpop.f32.mrf.mxu0
    %v1043 = vadd.f32 %v799, %v1042
    %v1044 = vpop.f32.mrf.mxu0
    %v1045 = vadd.f32 %v800, %v1044
    %1046 = vdwg.mxu0
    %v1047 = vxor.u32 %v996, 2147483648
    %v1048 = vxor.u32 %v1000, 2147483648
    %v1049 = vmul.f32 %v1047, 1.442695
    %v1050 = vpow.pop %v1049
    %v1051 = vmul.f32 %v1048, 1.442695
    %v1052 = vpow.pop %v1051
    %v1053 = vadd.f32 %v1050, 1.0
    %v1054 = vadd.f32 %v1052, 1.0
    %v1055 = vrcp.pop %v1053
    %v1056 = vmul.f32 1.0, %v1055
    %v1057 = vrcp.pop %v1054
    %v1058 = vmul.f32 1.0, %v1057
    %v1059 = vxor.u32 %v998, 2147483648
    %v1060 = vxor.u32 %v1002, 2147483648
    %v1061 = vmul.f32 %v1059, 1.442695
    %v1062 = vpow.pop %v1061
    %v1063 = vmul.f32 %v1060, 1.442695
    %v1064 = vpow.pop %v1063
    %v1065 = vadd.f32 %v1062, 1.0
    %v1066 = vadd.f32 %v1064, 1.0
    %v1067 = vrcp.pop %v1065
    %v1068 = vmul.f32 1.0, %v1067
    %v1069 = vrcp.pop %v1066
    %v1070 = vmul.f32 1.0, %v1069
    %v1071 = vtanh.pop %v1039
    %v1072 = vtanh.pop %v1043
    %v1073 = vxor.u32 %v1041, 2147483648
    %v1074 = vxor.u32 %v1045, 2147483648
    %v1075 = vmul.f32 %v1073, 1.442695
    %v1076 = vpow.pop %v1075
    %v1077 = vmul.f32 %v1074, 1.442695
    %v1078 = vpow.pop %v1077
    %v1079 = vadd.f32 %v1076, 1.0
    %v1080 = vadd.f32 %v1078, 1.0
    %v1081 = vrcp.pop %v1079
    %v1082 = vmul.f32 1.0, %v1081
    %v1083 = vrcp.pop %v1080
    %v1084 = vmul.f32 1.0, %v1083
    %v1085 = vmul.f32 %v1068, %v758
    %v1086 = vmul.f32 %v1070, %v759
    %v1087 = vmul.f32 %v1056, %v1071
    %v1088 = vmul.f32 %v1058, %v1072
    %v1089 = vadd.f32 %v1085, %v1087
    %v1090 = vadd.f32 %v1086, %v1088
    %v1091 = vtanh.pop %v1089
    %v1092 = vtanh.pop %v1090
    %v1093 = vmul.f32 %v1082, %v1091
    %v1094 = vmul.f32 %v1084, %v1092
    %v1095 = vpack.c.bf16 %v1094, %v1093
    %v1096 = vld [vmem:[#allocation2 + $0x80] sm:$0xff]
    %v1097 = vld [vmem:[#allocation2 + $0x88] sm:$0xff]
    %v1098 = vld [vmem:[#allocation2 + $0x90] sm:$0xff]
    %v1099 = vld [vmem:[#allocation2 + $0x98] sm:$0xff]
    %v1100 = vld [vmem:[#allocation2 + $0xa0] sm:$0xff]
    %v1101 = vld [vmem:[#allocation2 + $0xa8] sm:$0xff]
    %v1102 = vld [vmem:[#allocation2 + $0xb0] sm:$0xff]
    %v1103 = vld [vmem:[#allocation2 + $0xb8] sm:$0xff]
    %1104 = vmatprep.subr.bf16.mxu0 %v926
    %1105 = vmatpush1.bf16.msra.mxu0 %v925
    %1106 = vmatprep.subr.bf16.mxu0 %v922
    %1107 = vmatpush1.bf16.msra.mxu0 %v921
    %1108 = vmatprep.subr.bf16.mxu0 %v918
    %1109 = vmatpush1.bf16.msra.mxu0 %v917
    %1110 = vmatprep.subr.bf16.mxu0 %v914
    %1111 = vmatpush1.bf16.msra.mxu0 %v913
    %1112 = vmatprep.subr.bf16.mxu0 %v910
    %1113 = vmatpush1.bf16.msra.mxu0 %v909
    %1114 = vmatprep.subr.bf16.mxu0 %v906
    %1115 = vmatpush1.bf16.msra.mxu0 %v905
    %1116 = vmatprep.subr.bf16.mxu0 %v902
    %1117 = vmatpush1.bf16.msra.mxu0 %v901
    %1118 = vmatprep.subr.bf16.mxu0 %v898
    %1119 = vmatpush1.bf16.msra.mxu0 %v897
    %1120 = vmatprep.subr.bf16.mxu0 0
    %1121 = vmatpush2.bf16.msra.mxu0 0
    %1122 = vmatprep.subr.bf16.mxu0 0
    %1123 = vmatpush2.bf16.msra.mxu0 0
    %1124 = vmatprep.subr.bf16.mxu0 0
    %1125 = vmatpush2.bf16.msra.mxu0 0
    %1126 = vmatprep.subr.bf16.mxu0 0
    %1127 = vmatpush2.bf16.msra.mxu0 0
    %1128 = vmatprep.subr.bf16.mxu0 0
    %1129 = vmatpush2.bf16.msra.mxu0 0
    %1130 = vmatprep.subr.bf16.mxu0 0
    %1131 = vmatpush2.bf16.msra.mxu0 0
    %1132 = vmatprep.subr.bf16.mxu0 0
    %1133 = vmatpush2.bf16.msra.mxu0 0
    %1134 = vmatprep.subr.bf16.mxu0 0
    %1135 = vmatpush2.bf16.msra.mxu0 0
    %1136 = vmatprep.mubr.bf16.mxu0 0
    %1137 = vmatmul.mubr.bf16.gmra.mxu0 %v1095
    %v1138 = vpop.f32.mrf.mxu0
    %v1139 = vadd.f32 %v1096, %v1138
    %v1140 = vpop.f32.mrf.mxu0
    %v1141 = vadd.f32 %v1097, %v1140
    %v1142 = vpop.f32.mrf.mxu0
    %v1143 = vadd.f32 %v1100, %v1142
    %v1144 = vpop.f32.mrf.mxu0
    %v1145 = vadd.f32 %v1101, %v1144
    %1146 = vdwg.mxu0
    %1147 = vmatprep.subr.bf16.mxu0 %v928
    %1148 = vmatpush1.bf16.msra.mxu0 %v927
    %1149 = vmatprep.subr.bf16.mxu0 %v924
    %1150 = vmatpush1.bf16.msra.mxu0 %v923
    %1151 = vmatprep.subr.bf16.mxu0 %v920
    %1152 = vmatpush1.bf16.msra.mxu0 %v919
    %1153 = vmatprep.subr.bf16.mxu0 %v916
    %1154 = vmatpush1.bf16.msra.mxu0 %v915
    %1155 = vmatprep.subr.bf16.mxu0 %v912
    %1156 = vmatpush1.bf16.msra.mxu0 %v911
    %1157 = vmatprep.subr.bf16.mxu0 %v908
    %1158 = vmatpush1.bf16.msra.mxu0 %v907
    %1159 = vmatprep.subr.bf16.mxu0 %v904
    %1160 = vmatpush1.bf16.msra.mxu0 %v903
    %1161 = vmatprep.subr.bf16.mxu0 %v900
    %1162 = vmatpush1.bf16.msra.mxu0 %v899
    %1163 = vmatprep.subr.bf16.mxu0 0
    %1164 = vmatpush2.bf16.msra.mxu0 0
    %1165 = vmatprep.subr.bf16.mxu0 0
    %1166 = vmatpush2.bf16.msra.mxu0 0
    %1167 = vmatprep.subr.bf16.mxu0 0
    %1168 = vmatpush2.bf16.msra.mxu0 0
    %1169 = vmatprep.subr.bf16.mxu0 0
    %1170 = vmatpush2.bf16.msra.mxu0 0
    %1171 = vmatprep.subr.bf16.mxu0 0
    %1172 = vmatpush2.bf16.msra.mxu0 0
    %1173 = vmatprep.subr.bf16.mxu0 0
    %1174 = vmatpush2.bf16.msra.mxu0 0
    %1175 = vmatprep.subr.bf16.mxu0 0
    %1176 = vmatpush2.bf16.msra.mxu0 0
    %1177 = vmatprep.subr.bf16.mxu0 0
    %1178 = vmatpush2.bf16.msra.mxu0 0
    %1179 = vmatprep.mubr.bf16.mxu0 0
    %1180 = vmatmul.mubr.bf16.gmra.mxu0 %v1095
    %v1181 = vpop.f32.mrf.mxu0
    %v1182 = vadd.f32 %v1098, %v1181
    %v1183 = vpop.f32.mrf.mxu0
    %v1184 = vadd.f32 %v1099, %v1183
    %v1185 = vpop.f32.mrf.mxu0
    %v1186 = vadd.f32 %v1102, %v1185
    %v1187 = vpop.f32.mrf.mxu0
    %v1188 = vadd.f32 %v1103, %v1187
    %1189 = vdwg.mxu0
    %v1190 = vxor.u32 %v1139, 2147483648
    %v1191 = vxor.u32 %v1143, 2147483648
    %v1192 = vmul.f32 %v1190, 1.442695
    %v1193 = vpow.pop %v1192
    %v1194 = vmul.f32 %v1191, 1.442695
    %v1195 = vpow.pop %v1194
    %v1196 = vadd.f32 %v1193, 1.0
    %v1197 = vadd.f32 %v1195, 1.0
    %v1198 = vrcp.pop %v1196
    %v1199 = vmul.f32 1.0, %v1198
    %v1200 = vrcp.pop %v1197
    %v1201 = vmul.f32 1.0, %v1200
    %v1202 = vxor.u32 %v1141, 2147483648
    %v1203 = vxor.u32 %v1145, 2147483648
    %v1204 = vmul.f32 %v1202, 1.442695
    %v1205 = vpow.pop %v1204
    %v1206 = vmul.f32 %v1203, 1.442695
    %v1207 = vpow.pop %v1206
    %v1208 = vadd.f32 %v1205, 1.0
    %v1209 = vadd.f32 %v1207, 1.0
    %v1210 = vrcp.pop %v1208
    %v1211 = vmul.f32 1.0, %v1210
    %v1212 = vrcp.pop %v1209
    %v1213 = vmul.f32 1.0, %v1212
    %v1214 = vtanh.pop %v1182
    %v1215 = vtanh.pop %v1186
    %v1216 = vxor.u32 %v1184, 2147483648
    %v1217 = vxor.u32 %v1188, 2147483648
    %v1218 = vmul.f32 %v1216, 1.442695
    %v1219 = vpow.pop %v1218
    %v1220 = vmul.f32 %v1217, 1.442695
    %v1221 = vpow.pop %v1220
    %v1222 = vadd.f32 %v1219, 1.0
    %v1223 = vadd.f32 %v1221, 1.0
    %v1224 = vrcp.pop %v1222
    %v1225 = vmul.f32 1.0, %v1224
    %v1226 = vrcp.pop %v1223
    %v1227 = vmul.f32 1.0, %v1226
    %v1228 = vmul.f32 %v1211, %v1089
    %v1229 = vmul.f32 %v1213, %v1090
    %v1230 = vmul.f32 %v1199, %v1214
    %v1231 = vmul.f32 %v1201, %v1215
    %v1232 = vadd.f32 %v1228, %v1230
    %v1233 = vadd.f32 %v1229, %v1231
    %v1234 = vtanh.pop %v1232
    %v1235 = vtanh.pop %v1233
    %v1236 = vmul.f32 %v1225, %v1234
    %v1237 = vmul.f32 %v1227, %v1235
    %v1238 = vpack.c.bf16 %v1237, %v1236
    %v1239 = vld [vmem:[#allocation2 + $0xc0] sm:$0xff]
    %v1240 = vld [vmem:[#allocation2 + $0xc8] sm:$0xff]
    %v1241 = vld [vmem:[#allocation2 + $0xd0] sm:$0xff]
    %v1242 = vld [vmem:[#allocation2 + $0xd8] sm:$0xff]
    %v1243 = vld [vmem:[#allocation2 + $0xe0] sm:$0xff]
    %v1244 = vld [vmem:[#allocation2 + $0xe8] sm:$0xff]
    %v1245 = vld [vmem:[#allocation2 + $0xf0] sm:$0xff]
    %v1246 = vld [vmem:[#allocation2 + $0xf8] sm:$0xff]
    %1247 = vmatprep.subr.bf16.mxu0 %v926
    %1248 = vmatpush1.bf16.msra.mxu0 %v925
    %1249 = vmatprep.subr.bf16.mxu0 %v922
    %1250 = vmatpush1.bf16.msra.mxu0 %v921
    %1251 = vmatprep.subr.bf16.mxu0 %v918
    %1252 = vmatpush1.bf16.msra.mxu0 %v917
    %1253 = vmatprep.subr.bf16.mxu0 %v914
    %1254 = vmatpush1.bf16.msra.mxu0 %v913
    %1255 = vmatprep.subr.bf16.mxu0 %v910
    %1256 = vmatpush1.bf16.msra.mxu0 %v909
    %1257 = vmatprep.subr.bf16.mxu0 %v906
    %1258 = vmatpush1.bf16.msra.mxu0 %v905
    %1259 = vmatprep.subr.bf16.mxu0 %v902
    %1260 = vmatpush1.bf16.msra.mxu0 %v901
    %1261 = vmatprep.subr.bf16.mxu0 %v898
    %1262 = vmatpush1.bf16.msra.mxu0 %v897
    %1263 = vmatprep.subr.bf16.mxu0 0
    %1264 = vmatpush2.bf16.msra.mxu0 0
    %1265 = vmatprep.subr.bf16.mxu0 0
    %1266 = vmatpush2.bf16.msra.mxu0 0
    %1267 = vmatprep.subr.bf16.mxu0 0
    %1268 = vmatpush2.bf16.msra.mxu0 0
    %1269 = vmatprep.subr.bf16.mxu0 0
    %1270 = vmatpush2.bf16.msra.mxu0 0
    %1271 = vmatprep.subr.bf16.mxu0 0
    %1272 = vmatpush2.bf16.msra.mxu0 0
    %1273 = vmatprep.subr.bf16.mxu0 0
    %1274 = vmatpush2.bf16.msra.mxu0 0
    %1275 = vmatprep.subr.bf16.mxu0 0
    %1276 = vmatpush2.bf16.msra.mxu0 0
    %1277 = vmatprep.subr.bf16.mxu0 0
    %1278 = vmatpush2.bf16.msra.mxu0 0
    %1279 = vmatprep.mubr.bf16.mxu0 0
    %1280 = vmatmul.mubr.bf16.gmra.mxu0 %v1238
    %v1281 = vpop.f32.mrf.mxu0
    %v1282 = vadd.f32 %v1239, %v1281
    %v1283 = vpop.f32.mrf.mxu0
    %v1284 = vadd.f32 %v1240, %v1283
    %v1285 = vpop.f32.mrf.mxu0
    %v1286 = vadd.f32 %v1243, %v1285
    %v1287 = vpop.f32.mrf.mxu0
    %v1288 = vadd.f32 %v1244, %v1287
    %1289 = vdwg.mxu0
    %1290 = vmatprep.subr.bf16.mxu0 %v928
    %1291 = vmatpush1.bf16.msra.mxu0 %v927
    %1292 = vmatprep.subr.bf16.mxu0 %v924
    %1293 = vmatpush1.bf16.msra.mxu0 %v923
    %1294 = vmatprep.subr.bf16.mxu0 %v920
    %1295 = vmatpush1.bf16.msra.mxu0 %v919
    %1296 = vmatprep.subr.bf16.mxu0 %v916
    %1297 = vmatpush1.bf16.msra.mxu0 %v915
    %1298 = vmatprep.subr.bf16.mxu0 %v912
    %1299 = vmatpush1.bf16.msra.mxu0 %v911
    %1300 = vmatprep.subr.bf16.mxu0 %v908
    %1301 = vmatpush1.bf16.msra.mxu0 %v907
    %1302 = vmatprep.subr.bf16.mxu0 %v904
    %1303 = vmatpush1.bf16.msra.mxu0 %v903
    %1304 = vmatprep.subr.bf16.mxu0 %v900
    %1305 = vmatpush1.bf16.msra.mxu0 %v899
    %1306 = vmatprep.subr.bf16.mxu0 0
    %1307 = vmatpush2.bf16.msra.mxu0 0
    %1308 = vmatprep.subr.bf16.mxu0 0
    %1309 = vmatpush2.bf16.msra.mxu0 0
    %1310 = vmatprep.subr.bf16.mxu0 0
    %1311 = vmatpush2.bf16.msra.mxu0 0
    %1312 = vmatprep.subr.bf16.mxu0 0
    %1313 = vmatpush2.bf16.msra.mxu0 0
    %1314 = vmatprep.subr.bf16.mxu0 0
    %1315 = vmatpush2.bf16.msra.mxu0 0
    %1316 = vmatprep.subr.bf16.mxu0 0
    %1317 = vmatpush2.bf16.msra.mxu0 0
    %1318 = vmatprep.subr.bf16.mxu0 0
    %1319 = vmatpush2.bf16.msra.mxu0 0
    %1320 = vmatprep.subr.bf16.mxu0 0
    %1321 = vmatpush2.bf16.msra.mxu0 0
    %1322 = vmatprep.mubr.bf16.mxu0 0
    %1323 = vmatmul.mubr.bf16.gmra.mxu0 %v1238
    %v1324 = vpop.f32.mrf.mxu0
    %v1325 = vadd.f32 %v1241, %v1324
    %v1326 = vpop.f32.mrf.mxu0
    %v1327 = vadd.f32 %v1242, %v1326
    %v1328 = vpop.f32.mrf.mxu0
    %v1329 = vadd.f32 %v1245, %v1328
    %v1330 = vpop.f32.mrf.mxu0
    %v1331 = vadd.f32 %v1246, %v1330
    %1332 = vdwg.mxu0
    %v1333 = vxor.u32 %v1282, 2147483648
    %v1334 = vxor.u32 %v1286, 2147483648
    %v1335 = vmul.f32 %v1333, 1.442695
    %v1336 = vpow.pop %v1335
    %v1337 = vmul.f32 %v1334, 1.442695
    %v1338 = vpow.pop %v1337
    %v1339 = vadd.f32 %v1336, 1.0
    %v1340 = vadd.f32 %v1338, 1.0
    %v1341 = vrcp.pop %v1339
    %v1342 = vmul.f32 1.0, %v1341
    %v1343 = vrcp.pop %v1340
    %v1344 = vmul.f32 1.0, %v1343
    %v1345 = vxor.u32 %v1284, 2147483648
    %v1346 = vxor.u32 %v1288, 2147483648
    %v1347 = vmul.f32 %v1345, 1.442695
    %v1348 = vpow.pop %v1347
    %v1349 = vmul.f32 %v1346, 1.442695
    %v1350 = vpow.pop %v1349
    %v1351 = vadd.f32 %v1348, 1.0
    %v1352 = vadd.f32 %v1350, 1.0
    %v1353 = vrcp.pop %v1351
    %v1354 = vmul.f32 1.0, %v1353
    %v1355 = vrcp.pop %v1352
    %v1356 = vmul.f32 1.0, %v1355
    %v1357 = vtanh.pop %v1325
    %v1358 = vtanh.pop %v1329
    %v1359 = vxor.u32 %v1327, 2147483648
    %v1360 = vxor.u32 %v1331, 2147483648
    %v1361 = vmul.f32 %v1359, 1.442695
    %v1362 = vpow.pop %v1361
    %v1363 = vmul.f32 %v1360, 1.442695
    %v1364 = vpow.pop %v1363
    %v1365 = vadd.f32 %v1362, 1.0
    %v1366 = vadd.f32 %v1364, 1.0
    %v1367 = vrcp.pop %v1365
    %v1368 = vmul.f32 1.0, %v1367
    %v1369 = vrcp.pop %v1366
    %v1370 = vmul.f32 1.0, %v1369
    %v1371 = vmul.f32 %v1354, %v1232
    %v1372 = vmul.f32 %v1356, %v1233
    %v1373 = vmul.f32 %v1342, %v1357
    %v1374 = vmul.f32 %v1344, %v1358
    %v1375 = vadd.f32 %v1371, %v1373
    %v1376 = vadd.f32 %v1372, %v1374
    %v1377 = vtanh.pop %v1375
    %v1378 = vtanh.pop %v1376
    %v1379 = vmul.f32 %v1368, %v1377
    %v1380 = vmul.f32 %v1370, %v1378
    %v1381 = vpack.c.bf16 %v1380, %v1379
    %v1382 = vld [vmem:[#allocation2 + $0x100] sm:$0xff]
    %v1383 = vld [vmem:[#allocation2 + $0x108] sm:$0xff]
    %v1384 = vld [vmem:[#allocation2 + $0x110] sm:$0xff]
    %v1385 = vld [vmem:[#allocation2 + $0x118] sm:$0xff]
    %v1386 = vld [vmem:[#allocation2 + $0x120] sm:$0xff]
    %v1387 = vld [vmem:[#allocation2 + $0x128] sm:$0xff]
    %v1388 = vld [vmem:[#allocation2 + $0x130] sm:$0xff]
    %v1389 = vld [vmem:[#allocation2 + $0x138] sm:$0xff]
    %1390 = vmatprep.subr.bf16.mxu0 %v926
    %1391 = vmatpush1.bf16.msra.mxu0 %v925
    %1392 = vmatprep.subr.bf16.mxu0 %v922
    %1393 = vmatpush1.bf16.msra.mxu0 %v921
    %1394 = vmatprep.subr.bf16.mxu0 %v918
    %1395 = vmatpush1.bf16.msra.mxu0 %v917
    %1396 = vmatprep.subr.bf16.mxu0 %v914
    %1397 = vmatpush1.bf16.msra.mxu0 %v913
    %1398 = vmatprep.subr.bf16.mxu0 %v910
    %1399 = vmatpush1.bf16.msra.mxu0 %v909
    %1400 = vmatprep.subr.bf16.mxu0 %v906
    %1401 = vmatpush1.bf16.msra.mxu0 %v905
    %1402 = vmatprep.subr.bf16.mxu0 %v902
    %1403 = vmatpush1.bf16.msra.mxu0 %v901
    %1404 = vmatprep.subr.bf16.mxu0 %v898
    %1405 = vmatpush1.bf16.msra.mxu0 %v897
    %1406 = vmatprep.subr.bf16.mxu0 0
    %1407 = vmatpush2.bf16.msra.mxu0 0
    %1408 = vmatprep.subr.bf16.mxu0 0
    %1409 = vmatpush2.bf16.msra.mxu0 0
    %1410 = vmatprep.subr.bf16.mxu0 0
    %1411 = vmatpush2.bf16.msra.mxu0 0
    %1412 = vmatprep.subr.bf16.mxu0 0
    %1413 = vmatpush2.bf16.msra.mxu0 0
    %1414 = vmatprep.subr.bf16.mxu0 0
    %1415 = vmatpush2.bf16.msra.mxu0 0
    %1416 = vmatprep.subr.bf16.mxu0 0
    %1417 = vmatpush2.bf16.msra.mxu0 0
    %1418 = vmatprep.subr.bf16.mxu0 0
    %1419 = vmatpush2.bf16.msra.mxu0 0
    %1420 = vmatprep.subr.bf16.mxu0 0
    %1421 = vmatpush2.bf16.msra.mxu0 0
    %1422 = vmatprep.mubr.bf16.mxu0 0
    %1423 = vmatmul.mubr.bf16.gmra.mxu0 %v1381
    %v1424 = vpop.f32.mrf.mxu0
    %v1425 = vadd.f32 %v1382, %v1424
    %v1426 = vpop.f32.mrf.mxu0
    %v1427 = vadd.f32 %v1383, %v1426
    %v1428 = vpop.f32.mrf.mxu0
    %v1429 = vadd.f32 %v1386, %v1428
    %v1430 = vpop.f32.mrf.mxu0
    %v1431 = vadd.f32 %v1387, %v1430
    %1432 = vdwg.mxu0
    %1433 = vmatprep.subr.bf16.mxu0 %v928
    %1434 = vmatpush1.bf16.msra.mxu0 %v927
    %1435 = vmatprep.subr.bf16.mxu0 %v924
    %1436 = vmatpush1.bf16.msra.mxu0 %v923
    %1437 = vmatprep.subr.bf16.mxu0 %v920
    %1438 = vmatpush1.bf16.msra.mxu0 %v919
    %1439 = vmatprep.subr.bf16.mxu0 %v916
    %1440 = vmatpush1.bf16.msra.mxu0 %v915
    %1441 = vmatprep.subr.bf16.mxu0 %v912
    %1442 = vmatpush1.bf16.msra.mxu0 %v911
    %1443 = vmatprep.subr.bf16.mxu0 %v908
    %1444 = vmatpush1.bf16.msra.mxu0 %v907
    %1445 = vmatprep.subr.bf16.mxu0 %v904
    %1446 = vmatpush1.bf16.msra.mxu0 %v903
    %1447 = vmatprep.subr.bf16.mxu0 %v900
    %1448 = vmatpush1.bf16.msra.mxu0 %v899
    %1449 = vmatprep.subr.bf16.mxu0 0
    %1450 = vmatpush2.bf16.msra.mxu0 0
    %1451 = vmatprep.subr.bf16.mxu0 0
    %1452 = vmatpush2.bf16.msra.mxu0 0
    %1453 = vmatprep.subr.bf16.mxu0 0
    %1454 = vmatpush2.bf16.msra.mxu0 0
    %1455 = vmatprep.subr.bf16.mxu0 0
    %1456 = vmatpush2.bf16.msra.mxu0 0
    %1457 = vmatprep.subr.bf16.mxu0 0
    %1458 = vmatpush2.bf16.msra.mxu0 0
    %1459 = vmatprep.subr.bf16.mxu0 0
    %1460 = vmatpush2.bf16.msra.mxu0 0
    %1461 = vmatprep.subr.bf16.mxu0 0
    %1462 = vmatpush2.bf16.msra.mxu0 0
    %1463 = vmatprep.subr.bf16.mxu0 0
    %1464 = vmatpush2.bf16.msra.mxu0 0
    %1465 = vmatprep.mubr.bf16.mxu0 0
    %1466 = vmatmul.mubr.bf16.gmra.mxu0 %v1381
    %v1467 = vpop.f32.mrf.mxu0
    %v1468 = vadd.f32 %v1384, %v1467
    %v1469 = vpop.f32.mrf.mxu0
    %v1470 = vadd.f32 %v1385, %v1469
    %v1471 = vpop.f32.mrf.mxu0
    %v1472 = vadd.f32 %v1388, %v1471
    %v1473 = vpop.f32.mrf.mxu0
    %v1474 = vadd.f32 %v1389, %v1473
    %1475 = vdwg.mxu0
    %v1476 = vxor.u32 %v1425, 2147483648
    %v1477 = vxor.u32 %v1429, 2147483648
    %v1478 = vmul.f32 %v1476, 1.442695
    %v1479 = vpow.pop %v1478
    %v1480 = vmul.f32 %v1477, 1.442695
    %v1481 = vpow.pop %v1480
    %v1482 = vadd.f32 %v1479, 1.0
    %v1483 = vadd.f32 %v1481, 1.0
    %v1484 = vrcp.pop %v1482
    %v1485 = vmul.f32 1.0, %v1484
    %v1486 = vrcp.pop %v1483
    %v1487 = vmul.f32 1.0, %v1486
    %v1488 = vxor.u32 %v1427, 2147483648
    %v1489 = vxor.u32 %v1431, 2147483648
    %v1490 = vmul.f32 %v1488, 1.442695
    %v1491 = vpow.pop %v1490
    %v1492 = vmul.f32 %v1489, 1.442695
    %v1493 = vpow.pop %v1492
    %v1494 = vadd.f32 %v1491, 1.0
    %v1495 = vadd.f32 %v1493, 1.0
    %v1496 = vrcp.pop %v1494
    %v1497 = vmul.f32 1.0, %v1496
    %v1498 = vrcp.pop %v1495
    %v1499 = vmul.f32 1.0, %v1498
    %v1500 = vtanh.pop %v1468
    %v1501 = vtanh.pop %v1472
    %v1502 = vxor.u32 %v1470, 2147483648
    %v1503 = vxor.u32 %v1474, 2147483648
    %v1504 = vmul.f32 %v1502, 1.442695
    %v1505 = vpow.pop %v1504
    %v1506 = vmul.f32 %v1503, 1.442695
    %v1507 = vpow.pop %v1506
    %v1508 = vadd.f32 %v1505, 1.0
    %v1509 = vadd.f32 %v1507, 1.0
    %v1510 = vrcp.pop %v1508
    %v1511 = vmul.f32 1.0, %v1510
    %v1512 = vrcp.pop %v1509
    %v1513 = vmul.f32 1.0, %v1512
    %v1514 = vmul.f32 %v1497, %v1375
    %v1515 = vmul.f32 %v1499, %v1376
    %v1516 = vmul.f32 %v1485, %v1500
    %v1517 = vmul.f32 %v1487, %v1501
    %v1518 = vadd.f32 %v1514, %v1516
    %v1519 = vadd.f32 %v1515, %v1517
    %v1520 = vtanh.pop %v1518
    %v1521 = vtanh.pop %v1519
    %v1522 = vmul.f32 %v1511, %v1520
    %v1523 = vmul.f32 %v1513, %v1521
    %v1524 = vpack.c.bf16 %v1523, %v1522
    %v1525 = vld [vmem:[#allocation2 + $0x140] sm:$0xff]
    %v1526 = vld [vmem:[#allocation2 + $0x148] sm:$0xff]
    %v1527 = vld [vmem:[#allocation2 + $0x150] sm:$0xff]
    %v1528 = vld [vmem:[#allocation2 + $0x158] sm:$0xff]
    %v1529 = vld [vmem:[#allocation2 + $0x160] sm:$0xff]
    %v1530 = vld [vmem:[#allocation2 + $0x168] sm:$0xff]
    %v1531 = vld [vmem:[#allocation2 + $0x170] sm:$0xff]
    %v1532 = vld [vmem:[#allocation2 + $0x178] sm:$0xff]
    %1533 = vmatprep.subr.bf16.mxu0 %v926
    %1534 = vmatpush1.bf16.msra.mxu0 %v925
    %1535 = vmatprep.subr.bf16.mxu0 %v922
    %1536 = vmatpush1.bf16.msra.mxu0 %v921
    %1537 = vmatprep.subr.bf16.mxu0 %v918
    %1538 = vmatpush1.bf16.msra.mxu0 %v917
    %1539 = vmatprep.subr.bf16.mxu0 %v914
    %1540 = vmatpush1.bf16.msra.mxu0 %v913
    %1541 = vmatprep.subr.bf16.mxu0 %v910
    %1542 = vmatpush1.bf16.msra.mxu0 %v909
    %1543 = vmatprep.subr.bf16.mxu0 %v906
    %1544 = vmatpush1.bf16.msra.mxu0 %v905
    %1545 = vmatprep.subr.bf16.mxu0 %v902
    %1546 = vmatpush1.bf16.msra.mxu0 %v901
    %1547 = vmatprep.subr.bf16.mxu0 %v898
    %1548 = vmatpush1.bf16.msra.mxu0 %v897
    %1549 = vmatprep.subr.bf16.mxu0 0
    %1550 = vmatpush2.bf16.msra.mxu0 0
    %1551 = vmatprep.subr.bf16.mxu0 0
    %1552 = vmatpush2.bf16.msra.mxu0 0
    %1553 = vmatprep.subr.bf16.mxu0 0
    %1554 = vmatpush2.bf16.msra.mxu0 0
    %1555 = vmatprep.subr.bf16.mxu0 0
    %1556 = vmatpush2.bf16.msra.mxu0 0
    %1557 = vmatprep.subr.bf16.mxu0 0
    %1558 = vmatpush2.bf16.msra.mxu0 0
    %1559 = vmatprep.subr.bf16.mxu0 0
    %1560 = vmatpush2.bf16.msra.mxu0 0
    %1561 = vmatprep.subr.bf16.mxu0 0
    %1562 = vmatpush2.bf16.msra.mxu0 0
    %1563 = vmatprep.subr.bf16.mxu0 0
    %1564 = vmatpush2.bf16.msra.mxu0 0
    %1565 = vmatprep.mubr.bf16.mxu0 0
    %1566 = vmatmul.mubr.bf16.gmra.mxu0 %v1524
    %v1567 = vpop.f32.mrf.mxu0
    %v1568 = vadd.f32 %v1525, %v1567
    %v1569 = vpop.f32.mrf.mxu0
    %v1570 = vadd.f32 %v1526, %v1569
    %v1571 = vpop.f32.mrf.mxu0
    %v1572 = vadd.f32 %v1529, %v1571
    %v1573 = vpop.f32.mrf.mxu0
    %v1574 = vadd.f32 %v1530, %v1573
    %1575 = vdwg.mxu0
    %1576 = vmatprep.subr.bf16.mxu0 %v928
    %1577 = vmatpush1.bf16.msra.mxu0 %v927
    %1578 = vmatprep.subr.bf16.mxu0 %v924
    %1579 = vmatpush1.bf16.msra.mxu0 %v923
    %1580 = vmatprep.subr.bf16.mxu0 %v920
    %1581 = vmatpush1.bf16.msra.mxu0 %v919
    %1582 = vmatprep.subr.bf16.mxu0 %v916
    %1583 = vmatpush1.bf16.msra.mxu0 %v915
    %1584 = vmatprep.subr.bf16.mxu0 %v912
    %1585 = vmatpush1.bf16.msra.mxu0 %v911
    %1586 = vmatprep.subr.bf16.mxu0 %v908
    %1587 = vmatpush1.bf16.msra.mxu0 %v907
    %1588 = vmatprep.subr.bf16.mxu0 %v904
    %1589 = vmatpush1.bf16.msra.mxu0 %v903
    %1590 = vmatprep.subr.bf16.mxu0 %v900
    %1591 = vmatpush1.bf16.msra.mxu0 %v899
    %1592 = vmatprep.subr.bf16.mxu0 0
    %1593 = vmatpush2.bf16.msra.mxu0 0
    %1594 = vmatprep.subr.bf16.mxu0 0
    %1595 = vmatpush2.bf16.msra.mxu0 0
    %1596 = vmatprep.subr.bf16.mxu0 0
    %1597 = vmatpush2.bf16.msra.mxu0 0
    %1598 = vmatprep.subr.bf16.mxu0 0
    %1599 = vmatpush2.bf16.msra.mxu0 0
    %1600 = vmatprep.subr.bf16.mxu0 0
    %1601 = vmatpush2.bf16.msra.mxu0 0
    %1602 = vmatprep.subr.bf16.mxu0 0
    %1603 = vmatpush2.bf16.msra.mxu0 0
    %1604 = vmatprep.subr.bf16.mxu0 0
    %1605 = vmatpush2.bf16.msra.mxu0 0
    %1606 = vmatprep.subr.bf16.mxu0 0
    %1607 = vmatpush2.bf16.msra.mxu0 0
    %1608 = vmatprep.mubr.bf16.mxu0 0
    %1609 = vmatmul.mubr.bf16.gmra.mxu0 %v1524
    %v1610 = vpop.f32.mrf.mxu0
    %v1611 = vadd.f32 %v1527, %v1610
    %v1612 = vpop.f32.mrf.mxu0
    %v1613 = vadd.f32 %v1528, %v1612
    %v1614 = vpop.f32.mrf.mxu0
    %v1615 = vadd.f32 %v1531, %v1614
    %v1616 = vpop.f32.mrf.mxu0
    %v1617 = vadd.f32 %v1532, %v1616
    %1618 = vdwg.mxu0
    %v1619 = vxor.u32 %v1568, 2147483648
    %v1620 = vxor.u32 %v1572, 2147483648
    %v1621 = vmul.f32 %v1619, 1.442695
    %v1622 = vpow.pop %v1621
    %v1623 = vmul.f32 %v1620, 1.442695
    %v1624 = vpow.pop %v1623
    %v1625 = vadd.f32 %v1622, 1.0
    %v1626 = vadd.f32 %v1624, 1.0
    %v1627 = vrcp.pop %v1625
    %v1628 = vmul.f32 1.0, %v1627
    %v1629 = vrcp.pop %v1626
    %v1630 = vmul.f32 1.0, %v1629
    %v1631 = vxor.u32 %v1570, 2147483648
    %v1632 = vxor.u32 %v1574, 2147483648
    %v1633 = vmul.f32 %v1631, 1.442695
    %v1634 = vpow.pop %v1633
    %v1635 = vmul.f32 %v1632, 1.442695
    %v1636 = vpow.pop %v1635
    %v1637 = vadd.f32 %v1634, 1.0
    %v1638 = vadd.f32 %v1636, 1.0
    %v1639 = vrcp.pop %v1637
    %v1640 = vmul.f32 1.0, %v1639
    %v1641 = vrcp.pop %v1638
    %v1642 = vmul.f32 1.0, %v1641
    %v1643 = vtanh.pop %v1611
    %v1644 = vtanh.pop %v1615
    %v1645 = vxor.u32 %v1613, 2147483648
    %v1646 = vxor.u32 %v1617, 2147483648
    %v1647 = vmul.f32 %v1645, 1.442695
    %v1648 = vpow.pop %v1647
    %v1649 = vmul.f32 %v1646, 1.442695
    %v1650 = vpow.pop %v1649
    %v1651 = vadd.f32 %v1648, 1.0
    %v1652 = vadd.f32 %v1650, 1.0
    %v1653 = vrcp.pop %v1651
    %v1654 = vmul.f32 1.0, %v1653
    %v1655 = vrcp.pop %v1652
    %v1656 = vmul.f32 1.0, %v1655
    %v1657 = vmul.f32 %v1640, %v1518
    %v1658 = vmul.f32 %v1642, %v1519
    %v1659 = vmul.f32 %v1628, %v1643
    %v1660 = vmul.f32 %v1630, %v1644
    %v1661 = vadd.f32 %v1657, %v1659
    %v1662 = vadd.f32 %v1658, %v1660
    %v1663 = vtanh.pop %v1661
    %v1664 = vtanh.pop %v1662
    %v1665 = vmul.f32 %v1654, %v1663
    %v1666 = vmul.f32 %v1656, %v1664
    %v1667 = vpack.c.bf16 %v1666, %v1665
    %v1668 = vld [vmem:[#allocation2 + $0x180] sm:$0xff]
    %v1669 = vld [vmem:[#allocation2 + $0x188] sm:$0xff]
    %v1670 = vld [vmem:[#allocation2 + $0x190] sm:$0xff]
    %v1671 = vld [vmem:[#allocation2 + $0x198] sm:$0xff]
    %v1672 = vld [vmem:[#allocation2 + $0x1a0] sm:$0xff]
    %v1673 = vld [vmem:[#allocation2 + $0x1a8] sm:$0xff]
    %v1674 = vld [vmem:[#allocation2 + $0x1b0] sm:$0xff]
    %v1675 = vld [vmem:[#allocation2 + $0x1b8] sm:$0xff]
    %1676 = vmatprep.subr.bf16.mxu0 %v926
    %1677 = vmatpush1.bf16.msra.mxu0 %v925
    %1678 = vmatprep.subr.bf16.mxu0 %v922
    %1679 = vmatpush1.bf16.msra.mxu0 %v921
    %1680 = vmatprep.subr.bf16.mxu0 %v918
    %1681 = vmatpush1.bf16.msra.mxu0 %v917
    %1682 = vmatprep.subr.bf16.mxu0 %v914
    %1683 = vmatpush1.bf16.msra.mxu0 %v913
    %1684 = vmatprep.subr.bf16.mxu0 %v910
    %1685 = vmatpush1.bf16.msra.mxu0 %v909
    %1686 = vmatprep.subr.bf16.mxu0 %v906
    %1687 = vmatpush1.bf16.msra.mxu0 %v905
    %1688 = vmatprep.subr.bf16.mxu0 %v902
    %1689 = vmatpush1.bf16.msra.mxu0 %v901
    %1690 = vmatprep.subr.bf16.mxu0 %v898
    %1691 = vmatpush1.bf16.msra.mxu0 %v897
    %1692 = vmatprep.subr.bf16.mxu0 0
    %1693 = vmatpush2.bf16.msra.mxu0 0
    %1694 = vmatprep.subr.bf16.mxu0 0
    %1695 = vmatpush2.bf16.msra.mxu0 0
    %1696 = vmatprep.subr.bf16.mxu0 0
    %1697 = vmatpush2.bf16.msra.mxu0 0
    %1698 = vmatprep.subr.bf16.mxu0 0
    %1699 = vmatpush2.bf16.msra.mxu0 0
    %1700 = vmatprep.subr.bf16.mxu0 0
    %1701 = vmatpush2.bf16.msra.mxu0 0
    %1702 = vmatprep.subr.bf16.mxu0 0
    %1703 = vmatpush2.bf16.msra.mxu0 0
    %1704 = vmatprep.subr.bf16.mxu0 0
    %1705 = vmatpush2.bf16.msra.mxu0 0
    %1706 = vmatprep.subr.bf16.mxu0 0
    %1707 = vmatpush2.bf16.msra.mxu0 0
    %1708 = vmatprep.mubr.bf16.mxu0 0
    %1709 = vmatmul.mubr.bf16.gmra.mxu0 %v1667
    %v1710 = vpop.f32.mrf.mxu0
    %v1711 = vadd.f32 %v1668, %v1710
    %v1712 = vpop.f32.mrf.mxu0
    %v1713 = vadd.f32 %v1669, %v1712
    %v1714 = vpop.f32.mrf.mxu0
    %v1715 = vadd.f32 %v1672, %v1714
    %v1716 = vpop.f32.mrf.mxu0
    %v1717 = vadd.f32 %v1673, %v1716
    %1718 = vdwg.mxu0
    %1719 = vmatprep.subr.bf16.mxu0 %v928
    %1720 = vmatpush1.bf16.msra.mxu0 %v927
    %1721 = vmatprep.subr.bf16.mxu0 %v924
    %1722 = vmatpush1.bf16.msra.mxu0 %v923
    %1723 = vmatprep.subr.bf16.mxu0 %v920
    %1724 = vmatpush1.bf16.msra.mxu0 %v919
    %1725 = vmatprep.subr.bf16.mxu0 %v916
    %1726 = vmatpush1.bf16.msra.mxu0 %v915
    %1727 = vmatprep.subr.bf16.mxu0 %v912
    %1728 = vmatpush1.bf16.msra.mxu0 %v911
    %1729 = vmatprep.subr.bf16.mxu0 %v908
    %1730 = vmatpush1.bf16.msra.mxu0 %v907
    %1731 = vmatprep.subr.bf16.mxu0 %v904
    %1732 = vmatpush1.bf16.msra.mxu0 %v903
    %1733 = vmatprep.subr.bf16.mxu0 %v900
    %1734 = vmatpush1.bf16.msra.mxu0 %v899
    %1735 = vmatprep.subr.bf16.mxu0 0
    %1736 = vmatpush2.bf16.msra.mxu0 0
    %1737 = vmatprep.subr.bf16.mxu0 0
    %1738 = vmatpush2.bf16.msra.mxu0 0
    %1739 = vmatprep.subr.bf16.mxu0 0
    %1740 = vmatpush2.bf16.msra.mxu0 0
    %1741 = vmatprep.subr.bf16.mxu0 0
    %1742 = vmatpush2.bf16.msra.mxu0 0
    %1743 = vmatprep.subr.bf16.mxu0 0
    %1744 = vmatpush2.bf16.msra.mxu0 0
    %1745 = vmatprep.subr.bf16.mxu0 0
    %1746 = vmatpush2.bf16.msra.mxu0 0
    %1747 = vmatprep.subr.bf16.mxu0 0
    %1748 = vmatpush2.bf16.msra.mxu0 0
    %1749 = vmatprep.subr.bf16.mxu0 0
    %1750 = vmatpush2.bf16.msra.mxu0 0
    %1751 = vmatprep.mubr.bf16.mxu0 0
    %1752 = vmatmul.mubr.bf16.gmra.mxu0 %v1667
    %v1753 = vpop.f32.mrf.mxu0
    %v1754 = vadd.f32 %v1670, %v1753
    %v1755 = vpop.f32.mrf.mxu0
    %v1756 = vadd.f32 %v1671, %v1755
    %v1757 = vpop.f32.mrf.mxu0
    %v1758 = vadd.f32 %v1674, %v1757
    %v1759 = vpop.f32.mrf.mxu0
    %v1760 = vadd.f32 %v1675, %v1759
    %1761 = vdwg.mxu0
    %v1762 = vxor.u32 %v1711, 2147483648
    %v1763 = vxor.u32 %v1715, 2147483648
    %v1764 = vmul.f32 %v1762, 1.442695
    %v1765 = vpow.pop %v1764
    %v1766 = vmul.f32 %v1763, 1.442695
    %v1767 = vpow.pop %v1766
    %v1768 = vadd.f32 %v1765, 1.0
    %v1769 = vadd.f32 %v1767, 1.0
    %v1770 = vrcp.pop %v1768
    %v1771 = vmul.f32 1.0, %v1770
    %v1772 = vrcp.pop %v1769
    %v1773 = vmul.f32 1.0, %v1772
    %v1774 = vxor.u32 %v1713, 2147483648
    %v1775 = vxor.u32 %v1717, 2147483648
    %v1776 = vmul.f32 %v1774, 1.442695
    %v1777 = vpow.pop %v1776
    %v1778 = vmul.f32 %v1775, 1.442695
    %v1779 = vpow.pop %v1778
    %v1780 = vadd.f32 %v1777, 1.0
    %v1781 = vadd.f32 %v1779, 1.0
    %v1782 = vrcp.pop %v1780
    %v1783 = vmul.f32 1.0, %v1782
    %v1784 = vrcp.pop %v1781
    %v1785 = vmul.f32 1.0, %v1784
    %v1786 = vtanh.pop %v1754
    %v1787 = vtanh.pop %v1758
    %v1788 = vxor.u32 %v1756, 2147483648
    %v1789 = vxor.u32 %v1760, 2147483648
    %v1790 = vmul.f32 %v1788, 1.442695
    %v1791 = vpow.pop %v1790
    %v1792 = vmul.f32 %v1789, 1.442695
    %v1793 = vpow.pop %v1792
    %v1794 = vadd.f32 %v1791, 1.0
    %v1795 = vadd.f32 %v1793, 1.0
    %v1796 = vrcp.pop %v1794
    %v1797 = vmul.f32 1.0, %v1796
    %v1798 = vrcp.pop %v1795
    %v1799 = vmul.f32 1.0, %v1798
    %v1800 = vmul.f32 %v1783, %v1661
    %v1801 = vmul.f32 %v1785, %v1662
    %v1802 = vmul.f32 %v1771, %v1786
    %v1803 = vmul.f32 %v1773, %v1787
    %v1804 = vadd.f32 %v1800, %v1802
    %v1805 = vadd.f32 %v1801, %v1803
    %v1806 = vtanh.pop %v1804
    %v1807 = vtanh.pop %v1805
    %v1808 = vmul.f32 %v1797, %v1806
    %v1809 = vmul.f32 %v1799, %v1807
    %v1810 = vpack.c.bf16 %v1809, %v1808
    %v1811 = vld [vmem:[#allocation2 + $0x1c0] sm:$0xff]
    %v1812 = vld [vmem:[#allocation2 + $0x1c8] sm:$0xff]
    %v1813 = vld [vmem:[#allocation2 + $0x1d0] sm:$0xff]
    %v1814 = vld [vmem:[#allocation2 + $0x1d8] sm:$0xff]
    %v1815 = vld [vmem:[#allocation2 + $0x1e0] sm:$0xff]
    %v1816 = vld [vmem:[#allocation2 + $0x1e8] sm:$0xff]
    %v1817 = vld [vmem:[#allocation2 + $0x1f0] sm:$0xff]
    %v1818 = vld [vmem:[#allocation2 + $0x1f8] sm:$0xff]
    %1819 = vmatprep.subr.bf16.mxu0 %v926
    %1820 = vmatpush1.bf16.msra.mxu0 %v925
    %1821 = vmatprep.subr.bf16.mxu0 %v922
    %1822 = vmatpush1.bf16.msra.mxu0 %v921
    %1823 = vmatprep.subr.bf16.mxu0 %v918
    %1824 = vmatpush1.bf16.msra.mxu0 %v917
    %1825 = vmatprep.subr.bf16.mxu0 %v914
    %1826 = vmatpush1.bf16.msra.mxu0 %v913
    %1827 = vmatprep.subr.bf16.mxu0 %v910
    %1828 = vmatpush1.bf16.msra.mxu0 %v909
    %1829 = vmatprep.subr.bf16.mxu0 %v906
    %1830 = vmatpush1.bf16.msra.mxu0 %v905
    %1831 = vmatprep.subr.bf16.mxu0 %v902
    %1832 = vmatpush1.bf16.msra.mxu0 %v901
    %1833 = vmatprep.subr.bf16.mxu0 %v898
    %1834 = vmatpush1.bf16.msra.mxu0 %v897
    %1835 = vmatprep.subr.bf16.mxu0 0
    %1836 = vmatpush2.bf16.msra.mxu0 0
    %1837 = vmatprep.subr.bf16.mxu0 0
    %1838 = vmatpush2.bf16.msra.mxu0 0
    %1839 = vmatprep.subr.bf16.mxu0 0
    %1840 = vmatpush2.bf16.msra.mxu0 0
    %1841 = vmatprep.subr.bf16.mxu0 0
    %1842 = vmatpush2.bf16.msra.mxu0 0
    %1843 = vmatprep.subr.bf16.mxu0 0
    %1844 = vmatpush2.bf16.msra.mxu0 0
    %1845 = vmatprep.subr.bf16.mxu0 0
    %1846 = vmatpush2.bf16.msra.mxu0 0
    %1847 = vmatprep.subr.bf16.mxu0 0
    %1848 = vmatpush2.bf16.msra.mxu0 0
    %1849 = vmatprep.subr.bf16.mxu0 0
    %1850 = vmatpush2.bf16.msra.mxu0 0
    %1851 = vmatprep.mubr.bf16.mxu0 0
    %1852 = vmatmul.mubr.bf16.gmra.mxu0 %v1810
    %v1853 = vpop.f32.mrf.mxu0
    %v1854 = vadd.f32 %v1811, %v1853
    %v1855 = vpop.f32.mrf.mxu0
    %v1856 = vadd.f32 %v1812, %v1855
    %v1857 = vpop.f32.mrf.mxu0
    %v1858 = vadd.f32 %v1815, %v1857
    %v1859 = vpop.f32.mrf.mxu0
    %v1860 = vadd.f32 %v1816, %v1859
    %1861 = vdwg.mxu0
    %1862 = vmatprep.subr.bf16.mxu0 %v928
    %1863 = vmatpush1.bf16.msra.mxu0 %v927
    %1864 = vmatprep.subr.bf16.mxu0 %v924
    %1865 = vmatpush1.bf16.msra.mxu0 %v923
    %1866 = vmatprep.subr.bf16.mxu0 %v920
    %1867 = vmatpush1.bf16.msra.mxu0 %v919
    %1868 = vmatprep.subr.bf16.mxu0 %v916
    %1869 = vmatpush1.bf16.msra.mxu0 %v915
    %1870 = vmatprep.subr.bf16.mxu0 %v912
    %1871 = vmatpush1.bf16.msra.mxu0 %v911
    %1872 = vmatprep.subr.bf16.mxu0 %v908
    %1873 = vmatpush1.bf16.msra.mxu0 %v907
    %1874 = vmatprep.subr.bf16.mxu0 %v904
    %1875 = vmatpush1.bf16.msra.mxu0 %v903
    %1876 = vmatprep.subr.bf16.mxu0 %v900
    %1877 = vmatpush1.bf16.msra.mxu0 %v899
    %1878 = vmatprep.subr.bf16.mxu0 0
    %1879 = vmatpush2.bf16.msra.mxu0 0
    %1880 = vmatprep.subr.bf16.mxu0 0
    %1881 = vmatpush2.bf16.msra.mxu0 0
    %1882 = vmatprep.subr.bf16.mxu0 0
    %1883 = vmatpush2.bf16.msra.mxu0 0
    %1884 = vmatprep.subr.bf16.mxu0 0
    %1885 = vmatpush2.bf16.msra.mxu0 0
    %1886 = vmatprep.subr.bf16.mxu0 0
    %1887 = vmatpush2.bf16.msra.mxu0 0
    %1888 = vmatprep.subr.bf16.mxu0 0
    %1889 = vmatpush2.bf16.msra.mxu0 0
    %1890 = vmatprep.subr.bf16.mxu0 0
    %1891 = vmatpush2.bf16.msra.mxu0 0
    %1892 = vmatprep.subr.bf16.mxu0 0
    %1893 = vmatpush2.bf16.msra.mxu0 0
    %1894 = vmatprep.mubr.bf16.mxu0 0
    %1895 = vmatmul.mubr.bf16.gmra.mxu0 %v1810
    %v1896 = vpop.f32.mrf.mxu0
    %v1897 = vadd.f32 %v1813, %v1896
    %v1898 = vpop.f32.mrf.mxu0
    %v1899 = vadd.f32 %v1814, %v1898
    %v1900 = vpop.f32.mrf.mxu0
    %v1901 = vadd.f32 %v1817, %v1900
    %v1902 = vpop.f32.mrf.mxu0
    %v1903 = vadd.f32 %v1818, %v1902
    %1904 = vdwg.mxu0
    %v1905 = vxor.u32 %v1854, 2147483648
    %v1906 = vxor.u32 %v1858, 2147483648
    %v1907 = vmul.f32 %v1905, 1.442695
    %v1908 = vpow.pop %v1907
    %v1909 = vmul.f32 %v1906, 1.442695
    %v1910 = vpow.pop %v1909
    %v1911 = vadd.f32 %v1908, 1.0
    %v1912 = vadd.f32 %v1910, 1.0
    %v1913 = vrcp.pop %v1911
    %v1914 = vmul.f32 1.0, %v1913
    %v1915 = vrcp.pop %v1912
    %v1916 = vmul.f32 1.0, %v1915
    %v1917 = vxor.u32 %v1856, 2147483648
    %v1918 = vxor.u32 %v1860, 2147483648
    %v1919 = vmul.f32 %v1917, 1.442695
    %v1920 = vpow.pop %v1919
    %v1921 = vmul.f32 %v1918, 1.442695
    %v1922 = vpow.pop %v1921
    %v1923 = vadd.f32 %v1920, 1.0
    %v1924 = vadd.f32 %v1922, 1.0
    %v1925 = vrcp.pop %v1923
    %v1926 = vmul.f32 1.0, %v1925
    %v1927 = vrcp.pop %v1924
    %v1928 = vmul.f32 1.0, %v1927
    %v1929 = vtanh.pop %v1897
    %v1930 = vtanh.pop %v1901
    %v1931 = vxor.u32 %v1899, 2147483648
    %v1932 = vxor.u32 %v1903, 2147483648
    %v1933 = vmul.f32 %v1931, 1.442695
    %v1934 = vpow.pop %v1933
    %v1935 = vmul.f32 %v1932, 1.442695
    %v1936 = vpow.pop %v1935
    %v1937 = vadd.f32 %v1934, 1.0
    %v1938 = vadd.f32 %v1936, 1.0
    %v1939 = vrcp.pop %v1937
    %v1940 = vmul.f32 1.0, %v1939
    %v1941 = vrcp.pop %v1938
    %v1942 = vmul.f32 1.0, %v1941
    %v1943 = vmul.f32 %v1926, %v1804
    %v1944 = vmul.f32 %v1928, %v1805
    %v1945 = vmul.f32 %v1914, %v1929
    %v1946 = vmul.f32 %v1916, %v1930
    %v1947 = vadd.f32 %v1943, %v1945
    %v1948 = vadd.f32 %v1944, %v1946
    %v1949 = vtanh.pop %v1947
    %v1950 = vtanh.pop %v1948
    %v1951 = vmul.f32 %v1940, %v1949
    %v1952 = vmul.f32 %v1942, %v1950
    %v1953 = vpack.c.bf16 %v1952, %v1951
    %v1954 = vld [vmem:[#allocation2 + $0x200] sm:$0xff]
    %v1955 = vld [vmem:[#allocation2 + $0x208] sm:$0xff]
    %v1956 = vld [vmem:[#allocation2 + $0x210] sm:$0xff]
    %v1957 = vld [vmem:[#allocation2 + $0x218] sm:$0xff]
    %v1958 = vld [vmem:[#allocation2 + $0x220] sm:$0xff]
    %v1959 = vld [vmem:[#allocation2 + $0x228] sm:$0xff]
    %v1960 = vld [vmem:[#allocation2 + $0x230] sm:$0xff]
    %v1961 = vld [vmem:[#allocation2 + $0x238] sm:$0xff]
    %1962 = vmatprep.subr.bf16.mxu0 %v926
    %1963 = vmatpush1.bf16.msra.mxu0 %v925
    %1964 = vmatprep.subr.bf16.mxu0 %v922
    %1965 = vmatpush1.bf16.msra.mxu0 %v921
    %1966 = vmatprep.subr.bf16.mxu0 %v918
    %1967 = vmatpush1.bf16.msra.mxu0 %v917
    %1968 = vmatprep.subr.bf16.mxu0 %v914
    %1969 = vmatpush1.bf16.msra.mxu0 %v913
    %1970 = vmatprep.subr.bf16.mxu0 %v910
    %1971 = vmatpush1.bf16.msra.mxu0 %v909
    %1972 = vmatprep.subr.bf16.mxu0 %v906
    %1973 = vmatpush1.bf16.msra.mxu0 %v905
    %1974 = vmatprep.subr.bf16.mxu0 %v902
    %1975 = vmatpush1.bf16.msra.mxu0 %v901
    %1976 = vmatprep.subr.bf16.mxu0 %v898
    %1977 = vmatpush1.bf16.msra.mxu0 %v897
    %1978 = vmatprep.subr.bf16.mxu0 0
    %1979 = vmatpush2.bf16.msra.mxu0 0
    %1980 = vmatprep.subr.bf16.mxu0 0
    %1981 = vmatpush2.bf16.msra.mxu0 0
    %1982 = vmatprep.subr.bf16.mxu0 0
    %1983 = vmatpush2.bf16.msra.mxu0 0
    %1984 = vmatprep.subr.bf16.mxu0 0
    %1985 = vmatpush2.bf16.msra.mxu0 0
    %1986 = vmatprep.subr.bf16.mxu0 0
    %1987 = vmatpush2.bf16.msra.mxu0 0
    %1988 = vmatprep.subr.bf16.mxu0 0
    %1989 = vmatpush2.bf16.msra.mxu0 0
    %1990 = vmatprep.subr.bf16.mxu0 0
    %1991 = vmatpush2.bf16.msra.mxu0 0
    %1992 = vmatprep.subr.bf16.mxu0 0
    %1993 = vmatpush2.bf16.msra.mxu0 0
    %1994 = vmatprep.mubr.bf16.mxu0 0
    %1995 = vmatmul.mubr.bf16.gmra.mxu0 %v1953
    %v1996 = vpop.f32.mrf.mxu0
    %v1997 = vadd.f32 %v1954, %v1996
    %v1998 = vpop.f32.mrf.mxu0
    %v1999 = vadd.f32 %v1955, %v1998
    %v2000 = vpop.f32.mrf.mxu0
    %v2001 = vadd.f32 %v1958, %v2000
    %v2002 = vpop.f32.mrf.mxu0
    %v2003 = vadd.f32 %v1959, %v2002
    %2004 = vdwg.mxu0
    %2005 = vmatprep.subr.bf16.mxu0 %v928
    %2006 = vmatpush1.bf16.msra.mxu0 %v927
    %2007 = vmatprep.subr.bf16.mxu0 %v924
    %2008 = vmatpush1.bf16.msra.mxu0 %v923
    %2009 = vmatprep.subr.bf16.mxu0 %v920
    %2010 = vmatpush1.bf16.msra.mxu0 %v919
    %2011 = vmatprep.subr.bf16.mxu0 %v916
    %2012 = vmatpush1.bf16.msra.mxu0 %v915
    %2013 = vmatprep.subr.bf16.mxu0 %v912
    %2014 = vmatpush1.bf16.msra.mxu0 %v911
    %2015 = vmatprep.subr.bf16.mxu0 %v908
    %2016 = vmatpush1.bf16.msra.mxu0 %v907
    %2017 = vmatprep.subr.bf16.mxu0 %v904
    %2018 = vmatpush1.bf16.msra.mxu0 %v903
    %2019 = vmatprep.subr.bf16.mxu0 %v900
    %2020 = vmatpush1.bf16.msra.mxu0 %v899
    %2021 = vmatprep.subr.bf16.mxu0 0
    %2022 = vmatpush2.bf16.msra.mxu0 0
    %2023 = vmatprep.subr.bf16.mxu0 0
    %2024 = vmatpush2.bf16.msra.mxu0 0
    %2025 = vmatprep.subr.bf16.mxu0 0
    %2026 = vmatpush2.bf16.msra.mxu0 0
    %2027 = vmatprep.subr.bf16.mxu0 0
    %2028 = vmatpush2.bf16.msra.mxu0 0
    %2029 = vmatprep.subr.bf16.mxu0 0
    %2030 = vmatpush2.bf16.msra.mxu0 0
    %2031 = vmatprep.subr.bf16.mxu0 0
    %2032 = vmatpush2.bf16.msra.mxu0 0
    %2033 = vmatprep.subr.bf16.mxu0 0
    %2034 = vmatpush2.bf16.msra.mxu0 0
    %2035 = vmatprep.subr.bf16.mxu0 0
    %2036 = vmatpush2.bf16.msra.mxu0 0
    %2037 = vmatprep.mubr.bf16.mxu0 0
    %2038 = vmatmul.mubr.bf16.gmra.mxu0 %v1953
    %v2039 = vpop.f32.mrf.mxu0
    %v2040 = vadd.f32 %v1956, %v2039
    %v2041 = vpop.f32.mrf.mxu0
    %v2042 = vadd.f32 %v1957, %v2041
    %v2043 = vpop.f32.mrf.mxu0
    %v2044 = vadd.f32 %v1960, %v2043
    %v2045 = vpop.f32.mrf.mxu0
    %v2046 = vadd.f32 %v1961, %v2045
    %2047 = vdwg.mxu0
    %v2048 = vxor.u32 %v1997, 2147483648
    %v2049 = vxor.u32 %v2001, 2147483648
    %v2050 = vmul.f32 %v2048, 1.442695
    %v2051 = vpow.pop %v2050
    %v2052 = vmul.f32 %v2049, 1.442695
    %v2053 = vpow.pop %v2052
    %v2054 = vadd.f32 %v2051, 1.0
    %v2055 = vadd.f32 %v2053, 1.0
    %v2056 = vrcp.pop %v2054
    %v2057 = vmul.f32 1.0, %v2056
    %v2058 = vrcp.pop %v2055
    %v2059 = vmul.f32 1.0, %v2058
    %v2060 = vxor.u32 %v1999, 2147483648
    %v2061 = vxor.u32 %v2003, 2147483648
    %v2062 = vmul.f32 %v2060, 1.442695
    %v2063 = vpow.pop %v2062
    %v2064 = vmul.f32 %v2061, 1.442695
    %v2065 = vpow.pop %v2064
    %v2066 = vadd.f32 %v2063, 1.0
    %v2067 = vadd.f32 %v2065, 1.0
    %v2068 = vrcp.pop %v2066
    %v2069 = vmul.f32 1.0, %v2068
    %v2070 = vrcp.pop %v2067
    %v2071 = vmul.f32 1.0, %v2070
    %v2072 = vtanh.pop %v2040
    %v2073 = vtanh.pop %v2044
    %v2074 = vxor.u32 %v2042, 2147483648
    %v2075 = vxor.u32 %v2046, 2147483648
    %v2076 = vmul.f32 %v2074, 1.442695
    %v2077 = vpow.pop %v2076
    %v2078 = vmul.f32 %v2075, 1.442695
    %v2079 = vpow.pop %v2078
    %v2080 = vadd.f32 %v2077, 1.0
    %v2081 = vadd.f32 %v2079, 1.0
    %v2082 = vrcp.pop %v2080
    %v2083 = vmul.f32 1.0, %v2082
    %v2084 = vrcp.pop %v2081
    %v2085 = vmul.f32 1.0, %v2084
    %v2086 = vmul.f32 %v2069, %v1947
    %v2087 = vmul.f32 %v2071, %v1948
    %v2088 = vmul.f32 %v2057, %v2072
    %v2089 = vmul.f32 %v2059, %v2073
    %v2090 = vadd.f32 %v2086, %v2088
    %v2091 = vadd.f32 %v2087, %v2089
    %v2092 = vtanh.pop %v2090
    %v2093 = vtanh.pop %v2091
    %v2094 = vmul.f32 %v2083, %v2092
    %v2095 = vmul.f32 %v2085, %v2093
    %v2096 = vpack.c.bf16 %v2095, %v2094
    %v2097 = vld [vmem:[#allocation11] sm:$0xf]
    %v2098 = vld [vmem:[#allocation11 + $0x4] sm:$0xf]
    %v2099 = vld [vmem:[#allocation11 + $0x8] sm:$0xf]
    %v2100 = vld [vmem:[#allocation11 + $0xc] sm:$0xf]
    %v2101 = vld [vmem:[#allocation11 + $0x10] sm:$0xf]
    %v2102 = vld [vmem:[#allocation11 + $0x14] sm:$0xf]
    %v2103 = vld [vmem:[#allocation11 + $0x18] sm:$0xf]
    %v2104 = vld [vmem:[#allocation11 + $0x1c] sm:$0xf]
    %v2105 = vld [vmem:[#allocation11 + $0x20] sm:$0xf]
    %v2106 = vld [vmem:[#allocation11 + $0x24] sm:$0xf]
    %v2107 = vld [vmem:[#allocation11 + $0x28] sm:$0xf]
    %v2108 = vld [vmem:[#allocation11 + $0x2c] sm:$0xf]
    %v2109 = vld [vmem:[#allocation11 + $0x30] sm:$0xf]
    %v2110 = vld [vmem:[#allocation11 + $0x34] sm:$0xf]
    %v2111 = vld [vmem:[#allocation11 + $0x38] sm:$0xf]
    %v2112 = vld [vmem:[#allocation11 + $0x3c] sm:$0xf]
    %v2113 = vld [vmem:[%s5] sm:$0x1]
    %v2115 = vlaneseq
    %v2116 = vshrl.u32 %v2115, 7
    %v2117 = vsub.s32 0, %v2116
    %v2118 = vrot.slane %v2113, %v2117
    %v2136 = vunpack.c.l.b16 %v2097
    %v2137 = vunpack.c.l.b16 %v2098
    %v2138 = vunpack.c.l.b16 %v2099
    %v2139 = vunpack.c.l.b16 %v2100
    %v2140 = vunpack.c.l.b16 %v2101
    %v2141 = vunpack.c.l.b16 %v2102
    %v2142 = vunpack.c.l.b16 %v2103
    %v2143 = vunpack.c.l.b16 %v2104
    %v2144 = vunpack.c.l.b16 %v2105
    %v2145 = vunpack.c.l.b16 %v2106
    %v2146 = vunpack.c.l.b16 %v2107
    %v2147 = vunpack.c.l.b16 %v2108
    %v2148 = vunpack.c.l.b16 %v2109
    %v2149 = vunpack.c.l.b16 %v2110
    %v2150 = vunpack.c.l.b16 %v2111
    %v2151 = vunpack.c.l.b16 %v2112
    %v2152 = vpack.c.b16 %v2137, %v2136
    %v2153 = vpack.c.b16 %v2139, %v2138
    %v2154 = vpack.c.b16 %v2141, %v2140
    %v2155 = vpack.c.b16 %v2143, %v2142
    %v2156 = vpack.c.b16 %v2145, %v2144
    %v2157 = vpack.c.b16 %v2147, %v2146
    %v2158 = vpack.c.b16 %v2149, %v2148
    %v2159 = vpack.c.b16 %v2151, %v2150
    %2168 = vmatprep.subr.bf16.mxu0 0
    %2169 = vmatpush1.bf16.msra.mxu0 %v2159
    %2170 = vmatprep.subr.bf16.mxu0 0
    %2171 = vmatpush1.bf16.msra.mxu0 %v2158
    %2172 = vmatprep.subr.bf16.mxu0 0
    %2173 = vmatpush1.bf16.msra.mxu0 %v2157
    %2174 = vmatprep.subr.bf16.mxu0 0
    %2175 = vmatpush1.bf16.msra.mxu0 %v2156
    %2176 = vmatprep.subr.bf16.mxu0 0
    %2177 = vmatpush1.bf16.msra.mxu0 %v2155
    %2178 = vmatprep.subr.bf16.mxu0 0
    %2179 = vmatpush1.bf16.msra.mxu0 %v2154
    %2180 = vmatprep.subr.bf16.mxu0 0
    %2181 = vmatpush1.bf16.msra.mxu0 %v2153
    %2182 = vmatprep.subr.bf16.mxu0 0
    %2183 = vmatpush1.bf16.msra.mxu0 %v2152
    %2184 = vmatprep.subr.bf16.mxu0 0
    %2185 = vmatpush2.bf16.msra.mxu0 0
    %2186 = vmatprep.subr.bf16.mxu0 0
    %2187 = vmatpush2.bf16.msra.mxu0 0
    %2188 = vmatprep.subr.bf16.mxu0 0
    %2189 = vmatpush2.bf16.msra.mxu0 0
    %2190 = vmatprep.subr.bf16.mxu0 0
    %2191 = vmatpush2.bf16.msra.mxu0 0
    %2192 = vmatprep.subr.bf16.mxu0 0
    %2193 = vmatpush2.bf16.msra.mxu0 0
    %2194 = vmatprep.subr.bf16.mxu0 0
    %2195 = vmatpush2.bf16.msra.mxu0 0
    %2196 = vmatprep.subr.bf16.mxu0 0
    %2197 = vmatpush2.bf16.msra.mxu0 0
    %2198 = vmatprep.subr.bf16.mxu0 0
    %2199 = vmatpush2.bf16.msra.mxu0 0
    %2200 = vmatprep.mubr.bf16.mxu0 0
    %2201 = vmatmul.mubr.bf16.gmra.mxu0 %v2096
    %v2202 = vpop.f32.mrf.mxu0
    %v2203 = vadd.f32 %v2118, %v2202
    %v2204 = vpop.f32.mrf.mxu0
    %v2205 = vpop.f32.mrf.mxu0
    %v2206 = vadd.f32 %v2118, %v2205
    %v2207 = vpop.f32.mrf.mxu0
    %2208 = vdwg.mxu0
    %2209 = vst [vmem:[#allocation12] sm:$0xff] %v2203
    %2210 = vst [vmem:[#allocation12 + $0x8] sm:$0xff] %v2206
    // Predicated region
    $region46: #{tpu_custom_call.1} parent=1 // pred_check
      _
    $region47: #{tpu_custom_call.1} parent=1 // pred_check_branch
      %2212 = sbr.rel (0) target = $region49
    $region48: #{tpu_custom_call.1} parent=1 // pred_region
      %s2214 = ssub.s32 256, 256
      %2215 = vsyncadd [#allocation5], %s2214
      %s2216 = sshll.u32 [#allocation12], 4
      %s2217 = int_to_ptr.vmem [resolvable:$true] %s2216
      %2222 = dma.vmem_to_hbm [thread:$0]  %s2217, 256, %s6, [#allocation5], 128, 128, 8
    $region49: #{tpu_custom_call.1} parent=1 // pred_fallthru
      _
    // Predicated region
    $region50: #{tpu_custom_call.1} parent=1 // pred_check
      _
    $region51: #{tpu_custom_call.1} parent=1 // pred_check_branch
      %2224 = sbr.rel (0) target = $region53
    $region52: #{tpu_custom_call.1} parent=1 // pred_region
      %2225 = dma.done [#allocation5], 256
    $region53: #{tpu_custom_call.1} parent=1 // pred_fallthru
      _
    %2226 = vsyncpa [#allocation4], 1
    %2227 = vsyncpa [#allocation7], 1
    %2228 = vsyncpa [#allocation10], 1
    %2229 = vsyncpa [#allocation5], 1

</llo_original>
